<compile_context>
chip_gen: v7x
topology: tpu7x:2x2x1
jax: 0.10.0
libtpu: 0.0.40
codegen_flags: <defaults>
</compile_context>

<pallas_src>
import functools

import jax
import jax.numpy as jnp
from jax.experimental import pallas as pl
from jax.experimental.pallas import tpu as pltpu


def _round_up(x, m):
    return (x + m - 1) // m * m


# -----------------------------------------------------------------------------
# Fused Pallas kernel: encoder LSTM + heads(fc21|fc22|fc5∘fc21) + decoder LSTM
# + fc4, all in one grid step.
# -----------------------------------------------------------------------------
def _bvae_fused_kernel(
    emb_ref,        # (T*Bp, In)        bf16  embeddings, seq-major, flattened
    wih_ref,        # (In, 2*GW)        bf16  [enc_w_ih | dec_w_ih], packed gates
    bih_ref,        # (1, 2*GW)         f32   [enc_b | dec_b] (b_ih + b_hh)
    enc_whh_ref,    # (nh, GW)          bf16  encoder hidden->gates (packed)
    dec_whh_ref,    # (nh, GW)          bf16  decoder hidden->gates (packed)
    heads_w_ref,    # (nh, 2*Zp + HC)   bf16  [fc21 | fc22 | fc21@fc5]
    heads_b_ref,    # (1, 2*Zp + HC)    f32
    fc4_w_ref,      # (nh, Np)          bf16
    fc4_b_ref,      # (1, Np)           f32
    recon_ref,      # (T*Bp, Np)        f32   output
    mulv_ref,       # (Bp, 2*Zp)        f32   output [mu | logvar]
    xproj_scr,      # (T*Bp, 2*GW)      f32   scratch: hoisted input projections
    hseq_scr,       # (T*Bp, nh)        f32   scratch: decoder hidden sequence
):
    nh, GW = enc_whh_ref.shape
    Bp = mulv_ref.shape[0]
    TB = emb_ref.shape[0]
    T = TB // Bp
    ZW = mulv_ref.shape[1]          # 2 * Zp

    f32 = jnp.float32
    bf16 = jnp.bfloat16

    # Hoisted input projections for BOTH LSTMs as one MXU matmul:
    #   xproj[:, :GW] = emb @ enc_w_ih + enc_b,  xproj[:, GW:] = emb @ dec_w_ih + dec_b
    xproj_scr[...] = (
        jnp.dot(emb_ref[...], wih_ref[...], preferred_element_type=f32)
        + bih_ref[...])

    # Lane mask selecting the "g" gate (tanh) inside the packed [i|f|g|o] vector.
    lane = jax.lax.broadcasted_iota(jnp.int32, (Bp, GW), 1)
    g_mask = (lane >= 2 * nh) & (lane < 3 * nh)

    def lstm_step(xp, h, c, whh):
        # Packed gates: one (Bp, GW) recurrent MXU tile per step (bf16 operands,
        # f32 accumulate); all post-matmul gate math stays in f32.
        gates = xp + jnp.dot(h.astype(bf16), whh, preferred_element_type=f32)
        act = jnp.where(g_mask, jnp.tanh(gates), jax.nn.sigmoid(gates))
        i_g = act[:, 0 * nh:1 * nh]
        f_g = act[:, 1 * nh:2 * nh]
        g_g = act[:, 2 * nh:3 * nh]
        o_g = act[:, 3 * nh:4 * nh]
        c_new = f_g * c + i_g * g_g
        h_new = o_g * jnp.tanh(c_new)
        return h_new, c_new

    # ---------------- encoder LSTM ----------------
    enc_whh = enc_whh_ref[...]
    h = jnp.zeros((Bp, nh), f32)
    c = jnp.zeros((Bp, nh), f32)
    for t in range(T):                       # T static & tiny -> fully unrolled
        xp = xproj_scr[t * Bp:(t + 1) * Bp, 0:GW]
        h, c = lstm_step(xp, h, c, enc_whh)

    # Fused post-encoder heads on the last hidden state:
    #   [ mu | logvar | h0_dec ]   (h0_dec uses the folded fc5 o fc21; z = mu).
    heads = (jnp.dot(h.astype(bf16), heads_w_ref[...], preferred_element_type=f32)
             + heads_b_ref[...])
    mulv_ref[...] = heads[:, :ZW]
    h0 = heads[:, ZW:ZW + nh]

    # ---------------- decoder LSTM ----------------
    dec_whh = dec_whh_ref[...]
    h = h0
    c = jnp.zeros((Bp, nh), f32)
    for t in range(T):
        xp = xproj_scr[t * Bp:(t + 1) * Bp, GW:2 * GW]
        h, c = lstm_step(xp, h, c, dec_whh)
        hseq_scr[t * Bp:(t + 1) * Bp, :] = h

    # fc4 over the whole decoder hidden sequence as one MXU matmul.
    recon_ref[...] = (
        jnp.dot(hseq_scr[...].astype(bf16), fc4_w_ref[...],
                preferred_element_type=f32)
        + fc4_b_ref[...])


def _bvae_fused_call(emb2d, pp, Bp, ZW):
    """emb2d: (T*Bp, In) bf16 embeddings; pp: padded/packed params dict."""
    TB = emb2d.shape[0]
    nh, GW = pp["enc_w_hh"].shape
    Np = pp["fc4_w"].shape[1]

    def fullspec(shape):
        return pl.BlockSpec(shape, lambda: tuple(0 for _ in shape))

    recon_p, mulv_p = pl.pallas_call(
        _bvae_fused_kernel,
        out_shape=(
            jax.ShapeDtypeStruct((TB, Np), jnp.float32),
            jax.ShapeDtypeStruct((Bp, ZW), jnp.float32),
        ),
        in_specs=[
            fullspec(emb2d.shape),
            fullspec(pp["w_ih"].shape),
            fullspec(pp["b_ih"].shape),
            fullspec(pp["enc_w_hh"].shape),
            fullspec(pp["dec_w_hh"].shape),
            fullspec(pp["heads_w"].shape),
            fullspec(pp["heads_b"].shape),
            fullspec(pp["fc4_w"].shape),
            fullspec(pp["fc4_b"].shape),
        ],
        out_specs=(
            fullspec((TB, Np)),
            fullspec((Bp, ZW)),
        ),
        scratch_shapes=[
            pltpu.VMEM((TB, 2 * GW), jnp.float32),   # hoisted x-projections
            pltpu.VMEM((TB, nh), jnp.float32),       # decoder hidden sequence
        ],
    )(emb2d, pp["w_ih"], pp["b_ih"], pp["enc_w_hh"], pp["dec_w_hh"],
      pp["heads_w"], pp["heads_b"], pp["fc4_w"], pp["fc4_b"])
    return recon_p, mulv_p


# -----------------------------------------------------------------------------
# Parameter construction (synthetic init mirroring the PyTorch module) +
# packing/padding into the kernel layout.
# -----------------------------------------------------------------------------
def init_params(key, ntoken, ninp, nhid, z_dim):
    ks = jax.random.split(key, 16)
    u = lambda k, shape, r: jax.random.uniform(k, shape, jnp.float32, -r, r)
    stdv = 1.0 / float(nhid) ** 0.5

    return {
        # word_embeddings: uniform(-0.1, 0.1)
        "emb": u(ks[0], (ntoken, ninp), 0.1),
        # encoder LSTM (ninp -> nhid); weights stored transposed (in, 4H),
        # PyTorch gate order [i|f|g|o] packed contiguously.
        "enc_w_ih": u(ks[1], (ninp, 4 * nhid), stdv),
        "enc_w_hh": u(ks[2], (nhid, 4 * nhid), stdv),
        "enc_b": u(ks[3], (1, 4 * nhid), stdv) + u(ks[4], (1, 4 * nhid), stdv),
        # fc21 / fc22: uniform(-0.1, 0.1), bias 0
        "fc21_w": u(ks[5], (nhid, z_dim), 0.1),
        "fc21_b": jnp.zeros((1, z_dim), jnp.float32),
        "fc22_w": u(ks[6], (nhid, z_dim), 0.1),
        "fc22_b": jnp.zeros((1, z_dim), jnp.float32),
        # fc5: z_dim -> nhid
        "fc5_w": u(ks[7], (z_dim, nhid), 0.1),
        "fc5_b": jnp.zeros((1, nhid), jnp.float32),
        # decoder LSTM (ninp -> nhid)
        "dec_w_ih": u(ks[8], (ninp, 4 * nhid), stdv),
        "dec_w_hh": u(ks[9], (nhid, 4 * nhid), stdv),
        "dec_b": u(ks[10], (1, 4 * nhid), stdv) + u(ks[11], (1, 4 * nhid), stdv),
        # fc4: nhid -> ntoken
        "fc4_w": u(ks[12], (nhid, ntoken), 0.1),
        "fc4_b": jnp.zeros((1, ntoken), jnp.float32),
    }


def pad_params(params, ntoken, ninp, nhid, z_dim):
    """Pack gates, fuse projections/heads, pad lane dims, store weights bf16."""
    Zp = _round_up(z_dim, 128)
    Np = _round_up(ntoken, 128)
    HC = _round_up(nhid, 128)
    GW = _round_up(4 * nhid, 128)      # packed [i|f|g|o] gate width

    def padcols(x, cols):
        return jnp.pad(x, ((0, 0), (0, cols - x.shape[1])))

    bf = lambda x: x.astype(jnp.bfloat16)

    # Fused (encoder | decoder) input->gates projection; gates stay packed at
    # stride nhid (PyTorch layout), only the total width is padded to GW.
    w_ih = jnp.concatenate([padcols(params["enc_w_ih"], GW),
                            padcols(params["dec_w_ih"], GW)], axis=1)
    b_ih = jnp.concatenate([padcols(params["enc_b"], GW),
                            padcols(params["dec_b"], GW)], axis=1)

    # Fused post-encoder heads [fc21 | fc22 | fc5∘fc21] (exact in eval mode,
    # where z = mu):  h0_dec = h_enc @ (fc21_w @ fc5_w) + (fc21_b @ fc5_w + fc5_b)
    w_comb = params["fc21_w"] @ params["fc5_w"]            # (nhid, nhid)
    b_comb = params["fc21_b"] @ params["fc5_w"] + params["fc5_b"]
    heads_w = jnp.concatenate([padcols(params["fc21_w"], Zp),
                               padcols(params["fc22_w"], Zp),
                               padcols(w_comb, HC)], axis=1)
    heads_b = jnp.concatenate([padcols(params["fc21_b"], Zp),
                               padcols(params["fc22_b"], Zp),
                               padcols(b_comb, HC)], axis=1)

    return {
        "emb": params["emb"],                               # f32 (ntoken, ninp)
        "w_ih": bf(w_ih),                                   # (ninp, 2*GW)
        "b_ih": b_ih,                                       # (1, 2*GW) f32
        "enc_w_hh": bf(padcols(params["enc_w_hh"], GW)),    # (nhid, GW)
        "dec_w_hh": bf(padcols(params["dec_w_hh"], GW)),    # (nhid, GW)
        "heads_w": bf(heads_w),                             # (nhid, 2*Zp + HC)
        "heads_b": heads_b,                                 # f32
        "fc4_w": bf(padcols(params["fc4_w"], Np)),          # (nhid, Np)
        "fc4_b": padcols(params["fc4_b"], Np),              # f32
    }


# -----------------------------------------------------------------------------
# BVAE_LSTM forward (eval mode)
# -----------------------------------------------------------------------------
@functools.partial(jax.jit, static_argnames=("ntoken", "z_dim"))
def bvae_lstm_forward(padded_params, input_ids, *, ntoken, z_dim):
    """input_ids: (T, B) int32 token indices. Returns (recon, mu, logvar)."""
    T, B = input_ids.shape
    pp = padded_params
    Zp = _round_up(z_dim, 128)
    Np = pp["fc4_w"].shape[1]
    Bp = max(_round_up(B, 8), 8)

    # Embedding lookup (gather kept in plain JAX); dropout = identity (eval).
    emb = jnp.take(pp["emb"], input_ids, axis=0)               # (T, B, ninp)
    emb = jnp.pad(emb, ((0, 0), (0, Bp - B), (0, 0)))          # (T, Bp, ninp)
    emb2d = emb.reshape(T * Bp, -1).astype(jnp.bfloat16)

    recon_p, mulv_p = _bvae_fused_call(emb2d, pp, Bp, 2 * Zp)

    recon = recon_p.reshape(T, Bp, Np)[:, :B, :ntoken]
    mu = mulv_p[:B, :z_dim]
    logvar = mulv_p[:B, Zp:Zp + z_dim]
    return recon, mu, logvar


# -----------------------------------------------------------------------------
# Pure-JAX reference (eval-mode semantics, bf16-matched matmuls) for checking.
# -----------------------------------------------------------------------------
def _reference_forward(params, input_ids, nhid, z_dim):
    bf16 = jnp.bfloat16

    def mm(a, b):
        return jnp.dot(a.astype(bf16), b.astype(bf16),
                       preferred_element_type=jnp.float32)

    def lstm(emb, w_ih, w_hh, b, h0):
        T, B, _ = emb.shape
        h, c = h0, jnp.zeros((B, nhid), jnp.float32)
        hs = []
        for t in range(T):
            gates = mm(emb[t], w_ih) + mm(h, w_hh) + b
            i_g = jax.nn.sigmoid(gates[:, 0 * nhid:1 * nhid])
            f_g = jax.nn.sigmoid(gates[:, 1 * nhid:2 * nhid])
            g_g = jnp.tanh(gates[:, 2 * nhid:3 * nhid])
            o_g = jax.nn.sigmoid(gates[:, 3 * nhid:4 * nhid])
            c = f_g * c + i_g * g_g
            h = o_g * jnp.tanh(c)
            hs.append(h)
        return jnp.stack(hs, axis=0), h

    T, B = input_ids.shape
    emb = jnp.take(params["emb"], input_ids, axis=0)
    _, h_enc = lstm(emb, params["enc_w_ih"], params["enc_w_hh"],
                    params["enc_b"], jnp.zeros((B, nhid), jnp.float32))
    mu = mm(h_enc, params["fc21_w"]) + params["fc21_b"]
    logvar = mm(h_enc, params["fc22_w"]) + params["fc22_b"]
    z = mu                                     # eval-mode reparameterize
    h0 = mm(z, params["fc5_w"]) + params["fc5_b"]
    hdec, _ = lstm(emb, params["dec_w_ih"], params["dec_w_hh"],
                   params["dec_b"], h0)
    recon = (mm(hdec.reshape(T * B, nhid), params["fc4_w"]).reshape(T, B, -1)
             + params["fc4_b"])
    return recon, mu, logvar


if __name__ == "__main__":
    # Small shapes consistent with the module's forward.
    ntoken, ninp, nhid, z_dim = 64, 16, 32, 8
    T, B = 8, 4

    key = jax.random.PRNGKey(0)
    pkey, ikey = jax.random.split(key)
    params = init_params(pkey, ntoken, ninp, nhid, z_dim)
    padded = pad_params(params, ntoken, ninp, nhid, z_dim)
    input_ids = jax.random.randint(ikey, (T, B), 0, ntoken, dtype=jnp.int32)

    recon, mu, logvar = bvae_lstm_forward(padded, input_ids,
                                          ntoken=ntoken, z_dim=z_dim)
    jax.block_until_ready((recon, mu, logvar))

    assert recon.shape == (T, B, ntoken)
    assert mu.shape == (B, z_dim)
    assert logvar.shape == (B, z_dim)

    recon_r, mu_r, logvar_r = _reference_forward(params, input_ids, nhid, z_dim)
    for got, ref in ((recon, recon_r), (mu, mu_r), (logvar, logvar_r)):
        assert bool(jnp.all(jnp.isfinite(got)))
        err = float(jnp.max(jnp.abs(got - ref)))
        assert err < 5e-2, f"max abs diff vs reference too large: {err}"

    print("KERNEL_OK")
</pallas_src>

<mosaic_0001>
module attributes {stable_mosaic.version = 11 : i64} {
  func.func @_bvae_fused_kernel(%arg0: memref<64x16xbf16, #tpu.memory_space<vmem>>, %arg1: memref<16x256xbf16, #tpu.memory_space<vmem>>, %arg2: memref<1x256xf32, #tpu.memory_space<vmem>>, %arg3: memref<32x128xbf16, #tpu.memory_space<vmem>>, %arg4: memref<32x128xbf16, #tpu.memory_space<vmem>>, %arg5: memref<32x384xbf16, #tpu.memory_space<vmem>>, %arg6: memref<1x384xf32, #tpu.memory_space<vmem>>, %arg7: memref<32x128xbf16, #tpu.memory_space<vmem>>, %arg8: memref<1x128xf32, #tpu.memory_space<vmem>>, %arg9: memref<64x128xf32, #tpu.memory_space<vmem>>, %arg10: memref<8x256xf32, #tpu.memory_space<vmem>>, %arg11: memref<64x256xf32, #tpu.memory_space<vmem>>, %arg12: memref<64x32xf32, #tpu.memory_space<vmem>>) attributes {dimension_semantics = [], scalar_prefetch = 0 : i64, scratch_operands = 2 : i64, tpu.core_type = #tpu.core_type<tc>} {
    %c0 = arith.constant 0 : index
    %c0_0 = arith.constant 0 : index
    %0 = vector.load %arg0[%c0, %c0_0] : memref<64x16xbf16, #tpu.memory_space<vmem>>, vector<64x16xbf16>
    %c0_1 = arith.constant 0 : index
    %c0_2 = arith.constant 0 : index
    %1 = vector.load %arg1[%c0_1, %c0_2] : memref<16x256xbf16, #tpu.memory_space<vmem>>, vector<16x256xbf16>
    %cst = arith.constant dense<0.000000e+00> : vector<64x256xf32>
    %2 = tpu.matmul %0, %1, %cst {dimension_numbers = #tpu.dot_dimension_numbers<[1], [0], [0], [1], [0, 0, 1, 1], [], []>} : vector<64x16xbf16>, vector<16x256xbf16>, vector<64x256xf32> -> vector<64x256xf32>
    %c0_3 = arith.constant 0 : index
    %c0_4 = arith.constant 0 : index
    %3 = vector.load %arg2[%c0_3, %c0_4] : memref<1x256xf32, #tpu.memory_space<vmem>>, vector<1x256xf32>
    %4 = vector.broadcast %3 : vector<1x256xf32> to vector<64x256xf32>
    %5 = arith.addf %2, %4 : vector<64x256xf32>
    %c0_5 = arith.constant 0 : index
    %c0_6 = arith.constant 0 : index
    %6 = vector.load %arg11[%c0_5, %c0_6] : memref<64x256xf32, #tpu.memory_space<vmem>>, vector<64x256xf32>
    tpu.vector_store %arg11[%c0_5, %c0_6], %5 {strides = array<i32>} : memref<64x256xf32, #tpu.memory_space<vmem>>, vector<64x256xf32>,
    %7 = tpu.iota {dimensions = array<i32: 1>} : vector<8x128xi32>
    %c64_i32 = arith.constant 64 : i32
    %8 = vector.broadcast %c64_i32 : i32 to vector<8x128xi32>
    %9 = arith.cmpi sge, %7, %8 : vector<8x128xi32>
    %c96_i32 = arith.constant 96 : i32
    %10 = vector.broadcast %c96_i32 : i32 to vector<8x128xi32>
    %11 = arith.cmpi slt, %7, %10 : vector<8x128xi32>
    %12 = arith.andi %9, %11 : vector<8x128xi1>
    %c0_7 = arith.constant 0 : index
    %c0_8 = arith.constant 0 : index
    %13 = vector.load %arg3[%c0_7, %c0_8] : memref<32x128xbf16, #tpu.memory_space<vmem>>, vector<32x128xbf16>
    %cst_9 = arith.constant 0.000000e+00 : f32
    %14 = vector.broadcast %cst_9 : f32 to vector<8x32xf32>
    %cst_10 = arith.constant 0.000000e+00 : f32
    %15 = vector.broadcast %cst_10 : f32 to vector<8x32xf32>
    %c0_11 = arith.constant 0 : index
    %c0_12 = arith.constant 0 : index
    %16 = vector.load %arg11[%c0_11, %c0_12] : memref<64x256xf32, #tpu.memory_space<vmem>>, vector<8x128xf32>
    %17 = arith.truncf %14 : vector<8x32xf32> to vector<8x32xbf16>
    %cst_13 = arith.constant dense<0.000000e+00> : vector<8x128xf32>
    %18 = tpu.matmul %17, %13, %cst_13 {dimension_numbers = #tpu.dot_dimension_numbers<[1], [0], [0], [1], [0, 0, 1, 1], [], []>} : vector<8x32xbf16>, vector<32x128xbf16>, vector<8x128xf32> -> vector<8x128xf32>
    %19 = arith.addf %16, %18 : vector<8x128xf32>
    %20 = math.tanh %19 : vector<8x128xf32>
    %21 = arith.negf %19 : vector<8x128xf32>
    %22 = math.exp %21 : vector<8x128xf32>
    %cst_14 = arith.constant 1.000000e+00 : f32
    %23 = vector.broadcast %cst_14 : f32 to vector<8x128xf32>
    %24 = arith.addf %23, %22 : vector<8x128xf32>
    %25 = arith.divf %23, %24 : vector<8x128xf32>
    %26 = arith.select %12, %20, %25 : vector<8x128xi1>, vector<8x128xf32>
    %27 = vector.extract_strided_slice %26 {offsets = [0, 0], sizes = [8, 32], strides = [1, 1]} : vector<8x128xf32> to vector<8x32xf32>
    %28 = vector.extract_strided_slice %26 {offsets = [0, 32], sizes = [8, 32], strides = [1, 1]} : vector<8x128xf32> to vector<8x32xf32>
    %29 = vector.extract_strided_slice %26 {offsets = [0, 64], sizes = [8, 32], strides = [1, 1]} : vector<8x128xf32> to vector<8x32xf32>
    %30 = vector.extract_strided_slice %26 {offsets = [0, 96], sizes = [8, 32], strides = [1, 1]} : vector<8x128xf32> to vector<8x32xf32>
    %31 = arith.mulf %28, %15 : vector<8x32xf32>
    %32 = arith.mulf %27, %29 : vector<8x32xf32>
    %33 = arith.addf %31, %32 : vector<8x32xf32>
    %34 = math.tanh %33 : vector<8x32xf32>
    %35 = arith.mulf %30, %34 : vector<8x32xf32>
    %c8 = arith.constant 8 : index
    %c0_15 = arith.constant 0 : index
    %36 = vector.load %arg11[%c8, %c0_15] : memref<64x256xf32, #tpu.memory_space<vmem>>, vector<8x128xf32>
    %37 = arith.truncf %35 : vector<8x32xf32> to vector<8x32xbf16>
    %cst_16 = arith.constant dense<0.000000e+00> : vector<8x128xf32>
    %38 = tpu.matmul %37, %13, %cst_16 {dimension_numbers = #tpu.dot_dimension_numbers<[1], [0], [0], [1], [0, 0, 1, 1], [], []>} : vector<8x32xbf16>, vector<32x128xbf16>, vector<8x128xf32> -> vector<8x128xf32>
    %39 = arith.addf %36, %38 : vector<8x128xf32>
    %40 = math.tanh %39 : vector<8x128xf32>
    %41 = arith.negf %39 : vector<8x128xf32>
    %42 = math.exp %41 : vector<8x128xf32>
    %cst_17 = arith.constant 1.000000e+00 : f32
    %43 = vector.broadcast %cst_17 : f32 to vector<8x128xf32>
    %44 = arith.addf %43, %42 : vector<8x128xf32>
    %45 = arith.divf %43, %44 : vector<8x128xf32>
    %46 = arith.select %12, %40, %45 : vector<8x128xi1>, vector<8x128xf32>
    %47 = vector.extract_strided_slice %46 {offsets = [0, 0], sizes = [8, 32], strides = [1, 1]} : vector<8x128xf32> to vector<8x32xf32>
    %48 = vector.extract_strided_slice %46 {offsets = [0, 32], sizes = [8, 32], strides = [1, 1]} : vector<8x128xf32> to vector<8x32xf32>
    %49 = vector.extract_strided_slice %46 {offsets = [0, 64], sizes = [8, 32], strides = [1, 1]} : vector<8x128xf32> to vector<8x32xf32>
    %50 = vector.extract_strided_slice %46 {offsets = [0, 96], sizes = [8, 32], strides = [1, 1]} : vector<8x128xf32> to vector<8x32xf32>
    %51 = arith.mulf %48, %33 : vector<8x32xf32>
    %52 = arith.mulf %47, %49 : vector<8x32xf32>
    %53 = arith.addf %51, %52 : vector<8x32xf32>
    %54 = math.tanh %53 : vector<8x32xf32>
    %55 = arith.mulf %50, %54 : vector<8x32xf32>
    %c16 = arith.constant 16 : index
    %c0_18 = arith.constant 0 : index
    %56 = vector.load %arg11[%c16, %c0_18] : memref<64x256xf32, #tpu.memory_space<vmem>>, vector<8x128xf32>
    %57 = arith.truncf %55 : vector<8x32xf32> to vector<8x32xbf16>
    %cst_19 = arith.constant dense<0.000000e+00> : vector<8x128xf32>
    %58 = tpu.matmul %57, %13, %cst_19 {dimension_numbers = #tpu.dot_dimension_numbers<[1], [0], [0], [1], [0, 0, 1, 1], [], []>} : vector<8x32xbf16>, vector<32x128xbf16>, vector<8x128xf32> -> vector<8x128xf32>
    %59 = arith.addf %56, %58 : vector<8x128xf32>
    %60 = math.tanh %59 : vector<8x128xf32>
    %61 = arith.negf %59 : vector<8x128xf32>
    %62 = math.exp %61 : vector<8x128xf32>
    %cst_20 = arith.constant 1.000000e+00 : f32
    %63 = vector.broadcast %cst_20 : f32 to vector<8x128xf32>
    %64 = arith.addf %63, %62 : vector<8x128xf32>
    %65 = arith.divf %63, %64 : vector<8x128xf32>
    %66 = arith.select %12, %60, %65 : vector<8x128xi1>, vector<8x128xf32>
    %67 = vector.extract_strided_slice %66 {offsets = [0, 0], sizes = [8, 32], strides = [1, 1]} : vector<8x128xf32> to vector<8x32xf32>
    %68 = vector.extract_strided_slice %66 {offsets = [0, 32], sizes = [8, 32], strides = [1, 1]} : vector<8x128xf32> to vector<8x32xf32>
    %69 = vector.extract_strided_slice %66 {offsets = [0, 64], sizes = [8, 32], strides = [1, 1]} : vector<8x128xf32> to vector<8x32xf32>
    %70 = vector.extract_strided_slice %66 {offsets = [0, 96], sizes = [8, 32], strides = [1, 1]} : vector<8x128xf32> to vector<8x32xf32>
    %71 = arith.mulf %68, %53 : vector<8x32xf32>
    %72 = arith.mulf %67, %69 : vector<8x32xf32>
    %73 = arith.addf %71, %72 : vector<8x32xf32>
    %74 = math.tanh %73 : vector<8x32xf32>
    %75 = arith.mulf %70, %74 : vector<8x32xf32>
    %c24 = arith.constant 24 : index
    %c0_21 = arith.constant 0 : index
    %76 = vector.load %arg11[%c24, %c0_21] : memref<64x256xf32, #tpu.memory_space<vmem>>, vector<8x128xf32>
    %77 = arith.truncf %75 : vector<8x32xf32> to vector<8x32xbf16>
    %cst_22 = arith.constant dense<0.000000e+00> : vector<8x128xf32>
    %78 = tpu.matmul %77, %13, %cst_22 {dimension_numbers = #tpu.dot_dimension_numbers<[1], [0], [0], [1], [0, 0, 1, 1], [], []>} : vector<8x32xbf16>, vector<32x128xbf16>, vector<8x128xf32> -> vector<8x128xf32>
    %79 = arith.addf %76, %78 : vector<8x128xf32>
    %80 = math.tanh %79 : vector<8x128xf32>
    %81 = arith.negf %79 : vector<8x128xf32>
    %82 = math.exp %81 : vector<8x128xf32>
    %cst_23 = arith.constant 1.000000e+00 : f32
    %83 = vector.broadcast %cst_23 : f32 to vector<8x128xf32>
    %84 = arith.addf %83, %82 : vector<8x128xf32>
    %85 = arith.divf %83, %84 : vector<8x128xf32>
    %86 = arith.select %12, %80, %85 : vector<8x128xi1>, vector<8x128xf32>
    %87 = vector.extract_strided_slice %86 {offsets = [0, 0], sizes = [8, 32], strides = [1, 1]} : vector<8x128xf32> to vector<8x32xf32>
    %88 = vector.extract_strided_slice %86 {offsets = [0, 32], sizes = [8, 32], strides = [1, 1]} : vector<8x128xf32> to vector<8x32xf32>
    %89 = vector.extract_strided_slice %86 {offsets = [0, 64], sizes = [8, 32], strides = [1, 1]} : vector<8x128xf32> to vector<8x32xf32>
    %90 = vector.extract_strided_slice %86 {offsets = [0, 96], sizes = [8, 32], strides = [1, 1]} : vector<8x128xf32> to vector<8x32xf32>
    %91 = arith.mulf %88, %73 : vector<8x32xf32>
    %92 = arith.mulf %87, %89 : vector<8x32xf32>
    %93 = arith.addf %91, %92 : vector<8x32xf32>
    %94 = math.tanh %93 : vector<8x32xf32>
    %95 = arith.mulf %90, %94 : vector<8x32xf32>
    %c32 = arith.constant 32 : index
    %c0_24 = arith.constant 0 : index
    %96 = vector.load %arg11[%c32, %c0_24] : memref<64x256xf32, #tpu.memory_space<vmem>>, vector<8x128xf32>
    %97 = arith.truncf %95 : vector<8x32xf32> to vector<8x32xbf16>
    %cst_25 = arith.constant dense<0.000000e+00> : vector<8x128xf32>
    %98 = tpu.matmul %97, %13, %cst_25 {dimension_numbers = #tpu.dot_dimension_numbers<[1], [0], [0], [1], [0, 0, 1, 1], [], []>} : vector<8x32xbf16>, vector<32x128xbf16>, vector<8x128xf32> -> vector<8x128xf32>
    %99 = arith.addf %96, %98 : vector<8x128xf32>
    %100 = math.tanh %99 : vector<8x128xf32>
    %101 = arith.negf %99 : vector<8x128xf32>
    %102 = math.exp %101 : vector<8x128xf32>
    %cst_26 = arith.constant 1.000000e+00 : f32
    %103 = vector.broadcast %cst_26 : f32 to vector<8x128xf32>
    %104 = arith.addf %103, %102 : vector<8x128xf32>
    %105 = arith.divf %103, %104 : vector<8x128xf32>
    %106 = arith.select %12, %100, %105 : vector<8x128xi1>, vector<8x128xf32>
    %107 = vector.extract_strided_slice %106 {offsets = [0, 0], sizes = [8, 32], strides = [1, 1]} : vector<8x128xf32> to vector<8x32xf32>
    %108 = vector.extract_strided_slice %106 {offsets = [0, 32], sizes = [8, 32], strides = [1, 1]} : vector<8x128xf32> to vector<8x32xf32>
    %109 = vector.extract_strided_slice %106 {offsets = [0, 64], sizes = [8, 32], strides = [1, 1]} : vector<8x128xf32> to vector<8x32xf32>
    %110 = vector.extract_strided_slice %106 {offsets = [0, 96], sizes = [8, 32], strides = [1, 1]} : vector<8x128xf32> to vector<8x32xf32>
    %111 = arith.mulf %108, %93 : vector<8x32xf32>
    %112 = arith.mulf %107, %109 : vector<8x32xf32>
    %113 = arith.addf %111, %112 : vector<8x32xf32>
    %114 = math.tanh %113 : vector<8x32xf32>
    %115 = arith.mulf %110, %114 : vector<8x32xf32>
    %c40 = arith.constant 40 : index
    %c0_27 = arith.constant 0 : index
    %116 = vector.load %arg11[%c40, %c0_27] : memref<64x256xf32, #tpu.memory_space<vmem>>, vector<8x128xf32>
    %117 = arith.truncf %115 : vector<8x32xf32> to vector<8x32xbf16>
    %cst_28 = arith.constant dense<0.000000e+00> : vector<8x128xf32>
    %118 = tpu.matmul %117, %13, %cst_28 {dimension_numbers = #tpu.dot_dimension_numbers<[1], [0], [0], [1], [0, 0, 1, 1], [], []>} : vector<8x32xbf16>, vector<32x128xbf16>, vector<8x128xf32> -> vector<8x128xf32>
    %119 = arith.addf %116, %118 : vector<8x128xf32>
    %120 = math.tanh %119 : vector<8x128xf32>
    %121 = arith.negf %119 : vector<8x128xf32>
    %122 = math.exp %121 : vector<8x128xf32>
    %cst_29 = arith.constant 1.000000e+00 : f32
    %123 = vector.broadcast %cst_29 : f32 to vector<8x128xf32>
    %124 = arith.addf %123, %122 : vector<8x128xf32>
    %125 = arith.divf %123, %124 : vector<8x128xf32>
    %126 = arith.select %12, %120, %125 : vector<8x128xi1>, vector<8x128xf32>
    %127 = vector.extract_strided_slice %126 {offsets = [0, 0], sizes = [8, 32], strides = [1, 1]} : vector<8x128xf32> to vector<8x32xf32>
    %128 = vector.extract_strided_slice %126 {offsets = [0, 32], sizes = [8, 32], strides = [1, 1]} : vector<8x128xf32> to vector<8x32xf32>
    %129 = vector.extract_strided_slice %126 {offsets = [0, 64], sizes = [8, 32], strides = [1, 1]} : vector<8x128xf32> to vector<8x32xf32>
    %130 = vector.extract_strided_slice %126 {offsets = [0, 96], sizes = [8, 32], strides = [1, 1]} : vector<8x128xf32> to vector<8x32xf32>
    %131 = arith.mulf %128, %113 : vector<8x32xf32>
    %132 = arith.mulf %127, %129 : vector<8x32xf32>
    %133 = arith.addf %131, %132 : vector<8x32xf32>
    %134 = math.tanh %133 : vector<8x32xf32>
    %135 = arith.mulf %130, %134 : vector<8x32xf32>
    %c48 = arith.constant 48 : index
    %c0_30 = arith.constant 0 : index
    %136 = vector.load %arg11[%c48, %c0_30] : memref<64x256xf32, #tpu.memory_space<vmem>>, vector<8x128xf32>
    %137 = arith.truncf %135 : vector<8x32xf32> to vector<8x32xbf16>
    %cst_31 = arith.constant dense<0.000000e+00> : vector<8x128xf32>
    %138 = tpu.matmul %137, %13, %cst_31 {dimension_numbers = #tpu.dot_dimension_numbers<[1], [0], [0], [1], [0, 0, 1, 1], [], []>} : vector<8x32xbf16>, vector<32x128xbf16>, vector<8x128xf32> -> vector<8x128xf32>
    %139 = arith.addf %136, %138 : vector<8x128xf32>
    %140 = math.tanh %139 : vector<8x128xf32>
    %141 = arith.negf %139 : vector<8x128xf32>
    %142 = math.exp %141 : vector<8x128xf32>
    %cst_32 = arith.constant 1.000000e+00 : f32
    %143 = vector.broadcast %cst_32 : f32 to vector<8x128xf32>
    %144 = arith.addf %143, %142 : vector<8x128xf32>
    %145 = arith.divf %143, %144 : vector<8x128xf32>
    %146 = arith.select %12, %140, %145 : vector<8x128xi1>, vector<8x128xf32>
    %147 = vector.extract_strided_slice %146 {offsets = [0, 0], sizes = [8, 32], strides = [1, 1]} : vector<8x128xf32> to vector<8x32xf32>
    %148 = vector.extract_strided_slice %146 {offsets = [0, 32], sizes = [8, 32], strides = [1, 1]} : vector<8x128xf32> to vector<8x32xf32>
    %149 = vector.extract_strided_slice %146 {offsets = [0, 64], sizes = [8, 32], strides = [1, 1]} : vector<8x128xf32> to vector<8x32xf32>
    %150 = vector.extract_strided_slice %146 {offsets = [0, 96], sizes = [8, 32], strides = [1, 1]} : vector<8x128xf32> to vector<8x32xf32>
    %151 = arith.mulf %148, %133 : vector<8x32xf32>
    %152 = arith.mulf %147, %149 : vector<8x32xf32>
    %153 = arith.addf %151, %152 : vector<8x32xf32>
    %154 = math.tanh %153 : vector<8x32xf32>
    %155 = arith.mulf %150, %154 : vector<8x32xf32>
    %c56 = arith.constant 56 : index
    %c0_33 = arith.constant 0 : index
    %156 = vector.load %arg11[%c56, %c0_33] : memref<64x256xf32, #tpu.memory_space<vmem>>, vector<8x128xf32>
    %157 = arith.truncf %155 : vector<8x32xf32> to vector<8x32xbf16>
    %cst_34 = arith.constant dense<0.000000e+00> : vector<8x128xf32>
    %158 = tpu.matmul %157, %13, %cst_34 {dimension_numbers = #tpu.dot_dimension_numbers<[1], [0], [0], [1], [0, 0, 1, 1], [], []>} : vector<8x32xbf16>, vector<32x128xbf16>, vector<8x128xf32> -> vector<8x128xf32>
    %159 = arith.addf %156, %158 : vector<8x128xf32>
    %160 = math.tanh %159 : vector<8x128xf32>
    %161 = arith.negf %159 : vector<8x128xf32>
    %162 = math.exp %161 : vector<8x128xf32>
    %cst_35 = arith.constant 1.000000e+00 : f32
    %163 = vector.broadcast %cst_35 : f32 to vector<8x128xf32>
    %164 = arith.addf %163, %162 : vector<8x128xf32>
    %165 = arith.divf %163, %164 : vector<8x128xf32>
    %166 = arith.select %12, %160, %165 : vector<8x128xi1>, vector<8x128xf32>
    %167 = vector.extract_strided_slice %166 {offsets = [0, 0], sizes = [8, 32], strides = [1, 1]} : vector<8x128xf32> to vector<8x32xf32>
    %168 = vector.extract_strided_slice %166 {offsets = [0, 32], sizes = [8, 32], strides = [1, 1]} : vector<8x128xf32> to vector<8x32xf32>
    %169 = vector.extract_strided_slice %166 {offsets = [0, 64], sizes = [8, 32], strides = [1, 1]} : vector<8x128xf32> to vector<8x32xf32>
    %170 = vector.extract_strided_slice %166 {offsets = [0, 96], sizes = [8, 32], strides = [1, 1]} : vector<8x128xf32> to vector<8x32xf32>
    %171 = arith.mulf %168, %153 : vector<8x32xf32>
    %172 = arith.mulf %167, %169 : vector<8x32xf32>
    %173 = arith.addf %171, %172 : vector<8x32xf32>
    %174 = math.tanh %173 : vector<8x32xf32>
    %175 = arith.mulf %170, %174 : vector<8x32xf32>
    %176 = arith.truncf %175 : vector<8x32xf32> to vector<8x32xbf16>
    %c0_36 = arith.constant 0 : index
    %c0_37 = arith.constant 0 : index
    %177 = vector.load %arg5[%c0_36, %c0_37] : memref<32x384xbf16, #tpu.memory_space<vmem>>, vector<32x384xbf16>
    %cst_38 = arith.constant dense<0.000000e+00> : vector<8x384xf32>
    %178 = tpu.matmul %176, %177, %cst_38 {dimension_numbers = #tpu.dot_dimension_numbers<[1], [0], [0], [1], [0, 0, 1, 1], [], []>} : vector<8x32xbf16>, vector<32x384xbf16>, vector<8x384xf32> -> vector<8x384xf32>
    %c0_39 = arith.constant 0 : index
    %c0_40 = arith.constant 0 : index
    %179 = vector.load %arg6[%c0_39, %c0_40] : memref<1x384xf32, #tpu.memory_space<vmem>>, vector<1x384xf32>
    %180 = vector.broadcast %179 : vector<1x384xf32> to vector<8x384xf32>
    %181 = arith.addf %178, %180 : vector<8x384xf32>
    %182 = vector.extract_strided_slice %181 {offsets = [0, 0], sizes = [8, 256], strides = [1, 1]} : vector<8x384xf32> to vector<8x256xf32>
    %c0_41 = arith.constant 0 : index
    %c0_42 = arith.constant 0 : index
    %183 = vector.load %arg10[%c0_41, %c0_42] : memref<8x256xf32, #tpu.memory_space<vmem>>, vector<8x256xf32>
    tpu.vector_store %arg10[%c0_41, %c0_42], %182 {strides = array<i32>} : memref<8x256xf32, #tpu.memory_space<vmem>>, vector<8x256xf32>,
    %184 = vector.extract_strided_slice %181 {offsets = [0, 256], sizes = [8, 32], strides = [1, 1]} : vector<8x384xf32> to vector<8x32xf32>
    %c0_43 = arith.constant 0 : index
    %c0_44 = arith.constant 0 : index
    %185 = vector.load %arg4[%c0_43, %c0_44] : memref<32x128xbf16, #tpu.memory_space<vmem>>, vector<32x128xbf16>
    %cst_45 = arith.constant 0.000000e+00 : f32
    %186 = vector.broadcast %cst_45 : f32 to vector<8x32xf32>
    %c0_46 = arith.constant 0 : index
    %c128 = arith.constant 128 : index
    %187 = vector.load %arg11[%c0_46, %c128] : memref<64x256xf32, #tpu.memory_space<vmem>>, vector<8x128xf32>
    %188 = arith.truncf %184 : vector<8x32xf32> to vector<8x32xbf16>
    %cst_47 = arith.constant dense<0.000000e+00> : vector<8x128xf32>
    %189 = tpu.matmul %188, %185, %cst_47 {dimension_numbers = #tpu.dot_dimension_numbers<[1], [0], [0], [1], [0, 0, 1, 1], [], []>} : vector<8x32xbf16>, vector<32x128xbf16>, vector<8x128xf32> -> vector<8x128xf32>
    %190 = arith.addf %187, %189 : vector<8x128xf32>
    %191 = math.tanh %190 : vector<8x128xf32>
    %192 = arith.negf %190 : vector<8x128xf32>
    %193 = math.exp %192 : vector<8x128xf32>
    %cst_48 = arith.constant 1.000000e+00 : f32
    %194 = vector.broadcast %cst_48 : f32 to vector<8x128xf32>
    %195 = arith.addf %194, %193 : vector<8x128xf32>
    %196 = arith.divf %194, %195 : vector<8x128xf32>
    %197 = arith.select %12, %191, %196 : vector<8x128xi1>, vector<8x128xf32>
    %198 = vector.extract_strided_slice %197 {offsets = [0, 0], sizes = [8, 32], strides = [1, 1]} : vector<8x128xf32> to vector<8x32xf32>
    %199 = vector.extract_strided_slice %197 {offsets = [0, 32], sizes = [8, 32], strides = [1, 1]} : vector<8x128xf32> to vector<8x32xf32>
    %200 = vector.extract_strided_slice %197 {offsets = [0, 64], sizes = [8, 32], strides = [1, 1]} : vector<8x128xf32> to vector<8x32xf32>
    %201 = vector.extract_strided_slice %197 {offsets = [0, 96], sizes = [8, 32], strides = [1, 1]} : vector<8x128xf32> to vector<8x32xf32>
    %202 = arith.mulf %199, %186 : vector<8x32xf32>
    %203 = arith.mulf %198, %200 : vector<8x32xf32>
    %204 = arith.addf %202, %203 : vector<8x32xf32>
    %205 = math.tanh %204 : vector<8x32xf32>
    %206 = arith.mulf %201, %205 : vector<8x32xf32>
    %c0_49 = arith.constant 0 : index
    %c0_50 = arith.constant 0 : index
    %207 = vector.load %arg12[%c0_49, %c0_50] : memref<64x32xf32, #tpu.memory_space<vmem>>, vector<8x32xf32>
    tpu.vector_store %arg12[%c0_49, %c0_50], %206 {strides = array<i32>} : memref<64x32xf32, #tpu.memory_space<vmem>>, vector<8x32xf32>,
    %c8_51 = arith.constant 8 : index
    %c128_52 = arith.constant 128 : index
    %208 = vector.load %arg11[%c8_51, %c128_52] : memref<64x256xf32, #tpu.memory_space<vmem>>, vector<8x128xf32>
    %209 = arith.truncf %206 : vector<8x32xf32> to vector<8x32xbf16>
    %cst_53 = arith.constant dense<0.000000e+00> : vector<8x128xf32>
    %210 = tpu.matmul %209, %185, %cst_53 {dimension_numbers = #tpu.dot_dimension_numbers<[1], [0], [0], [1], [0, 0, 1, 1], [], []>} : vector<8x32xbf16>, vector<32x128xbf16>, vector<8x128xf32> -> vector<8x128xf32>
    %211 = arith.addf %208, %210 : vector<8x128xf32>
    %212 = math.tanh %211 : vector<8x128xf32>
    %213 = arith.negf %211 : vector<8x128xf32>
    %214 = math.exp %213 : vector<8x128xf32>
    %cst_54 = arith.constant 1.000000e+00 : f32
    %215 = vector.broadcast %cst_54 : f32 to vector<8x128xf32>
    %216 = arith.addf %215, %214 : vector<8x128xf32>
    %217 = arith.divf %215, %216 : vector<8x128xf32>
    %218 = arith.select %12, %212, %217 : vector<8x128xi1>, vector<8x128xf32>
    %219 = vector.extract_strided_slice %218 {offsets = [0, 0], sizes = [8, 32], strides = [1, 1]} : vector<8x128xf32> to vector<8x32xf32>
    %220 = vector.extract_strided_slice %218 {offsets = [0, 32], sizes = [8, 32], strides = [1, 1]} : vector<8x128xf32> to vector<8x32xf32>
    %221 = vector.extract_strided_slice %218 {offsets = [0, 64], sizes = [8, 32], strides = [1, 1]} : vector<8x128xf32> to vector<8x32xf32>
    %222 = vector.extract_strided_slice %218 {offsets = [0, 96], sizes = [8, 32], strides = [1, 1]} : vector<8x128xf32> to vector<8x32xf32>
    %223 = arith.mulf %220, %204 : vector<8x32xf32>
    %224 = arith.mulf %219, %221 : vector<8x32xf32>
    %225 = arith.addf %223, %224 : vector<8x32xf32>
    %226 = math.tanh %225 : vector<8x32xf32>
    %227 = arith.mulf %222, %226 : vector<8x32xf32>
    %c8_55 = arith.constant 8 : index
    %c0_56 = arith.constant 0 : index
    %228 = vector.load %arg12[%c8_55, %c0_56] : memref<64x32xf32, #tpu.memory_space<vmem>>, vector<8x32xf32>
    tpu.vector_store %arg12[%c8_55, %c0_56], %227 {strides = array<i32>} : memref<64x32xf32, #tpu.memory_space<vmem>>, vector<8x32xf32>,
    %c16_57 = arith.constant 16 : index
    %c128_58 = arith.constant 128 : index
    %229 = vector.load %arg11[%c16_57, %c128_58] : memref<64x256xf32, #tpu.memory_space<vmem>>, vector<8x128xf32>
    %230 = arith.truncf %227 : vector<8x32xf32> to vector<8x32xbf16>
    %cst_59 = arith.constant dense<0.000000e+00> : vector<8x128xf32>
    %231 = tpu.matmul %230, %185, %cst_59 {dimension_numbers = #tpu.dot_dimension_numbers<[1], [0], [0], [1], [0, 0, 1, 1], [], []>} : vector<8x32xbf16>, vector<32x128xbf16>, vector<8x128xf32> -> vector<8x128xf32>
    %232 = arith.addf %229, %231 : vector<8x128xf32>
    %233 = math.tanh %232 : vector<8x128xf32>
    %234 = arith.negf %232 : vector<8x128xf32>
    %235 = math.exp %234 : vector<8x128xf32>
    %cst_60 = arith.constant 1.000000e+00 : f32
    %236 = vector.broadcast %cst_60 : f32 to vector<8x128xf32>
    %237 = arith.addf %236, %235 : vector<8x128xf32>
    %238 = arith.divf %236, %237 : vector<8x128xf32>
    %239 = arith.select %12, %233, %238 : vector<8x128xi1>, vector<8x128xf32>
    %240 = vector.extract_strided_slice %239 {offsets = [0, 0], sizes = [8, 32], strides = [1, 1]} : vector<8x128xf32> to vector<8x32xf32>
    %241 = vector.extract_strided_slice %239 {offsets = [0, 32], sizes = [8, 32], strides = [1, 1]} : vector<8x128xf32> to vector<8x32xf32>
    %242 = vector.extract_strided_slice %239 {offsets = [0, 64], sizes = [8, 32], strides = [1, 1]} : vector<8x128xf32> to vector<8x32xf32>
    %243 = vector.extract_strided_slice %239 {offsets = [0, 96], sizes = [8, 32], strides = [1, 1]} : vector<8x128xf32> to vector<8x32xf32>
    %244 = arith.mulf %241, %225 : vector<8x32xf32>
    %245 = arith.mulf %240, %242 : vector<8x32xf32>
    %246 = arith.addf %244, %245 : vector<8x32xf32>
    %247 = math.tanh %246 : vector<8x32xf32>
    %248 = arith.mulf %243, %247 : vector<8x32xf32>
    %c16_61 = arith.constant 16 : index
    %c0_62 = arith.constant 0 : index
    %249 = vector.load %arg12[%c16_61, %c0_62] : memref<64x32xf32, #tpu.memory_space<vmem>>, vector<8x32xf32>
    tpu.vector_store %arg12[%c16_61, %c0_62], %248 {strides = array<i32>} : memref<64x32xf32, #tpu.memory_space<vmem>>, vector<8x32xf32>,
    %c24_63 = arith.constant 24 : index
    %c128_64 = arith.constant 128 : index
    %250 = vector.load %arg11[%c24_63, %c128_64] : memref<64x256xf32, #tpu.memory_space<vmem>>, vector<8x128xf32>
    %251 = arith.truncf %248 : vector<8x32xf32> to vector<8x32xbf16>
    %cst_65 = arith.constant dense<0.000000e+00> : vector<8x128xf32>
    %252 = tpu.matmul %251, %185, %cst_65 {dimension_numbers = #tpu.dot_dimension_numbers<[1], [0], [0], [1], [0, 0, 1, 1], [], []>} : vector<8x32xbf16>, vector<32x128xbf16>, vector<8x128xf32> -> vector<8x128xf32>
    %253 = arith.addf %250, %252 : vector<8x128xf32>
    %254 = math.tanh %253 : vector<8x128xf32>
    %255 = arith.negf %253 : vector<8x128xf32>
    %256 = math.exp %255 : vector<8x128xf32>
    %cst_66 = arith.constant 1.000000e+00 : f32
    %257 = vector.broadcast %cst_66 : f32 to vector<8x128xf32>
    %258 = arith.addf %257, %256 : vector<8x128xf32>
    %259 = arith.divf %257, %258 : vector<8x128xf32>
    %260 = arith.select %12, %254, %259 : vector<8x128xi1>, vector<8x128xf32>
    %261 = vector.extract_strided_slice %260 {offsets = [0, 0], sizes = [8, 32], strides = [1, 1]} : vector<8x128xf32> to vector<8x32xf32>
    %262 = vector.extract_strided_slice %260 {offsets = [0, 32], sizes = [8, 32], strides = [1, 1]} : vector<8x128xf32> to vector<8x32xf32>
    %263 = vector.extract_strided_slice %260 {offsets = [0, 64], sizes = [8, 32], strides = [1, 1]} : vector<8x128xf32> to vector<8x32xf32>
    %264 = vector.extract_strided_slice %260 {offsets = [0, 96], sizes = [8, 32], strides = [1, 1]} : vector<8x128xf32> to vector<8x32xf32>
    %265 = arith.mulf %262, %246 : vector<8x32xf32>
    %266 = arith.mulf %261, %263 : vector<8x32xf32>
    %267 = arith.addf %265, %266 : vector<8x32xf32>
    %268 = math.tanh %267 : vector<8x32xf32>
    %269 = arith.mulf %264, %268 : vector<8x32xf32>
    %c24_67 = arith.constant 24 : index
    %c0_68 = arith.constant 0 : index
    %270 = vector.load %arg12[%c24_67, %c0_68] : memref<64x32xf32, #tpu.memory_space<vmem>>, vector<8x32xf32>
    tpu.vector_store %arg12[%c24_67, %c0_68], %269 {strides = array<i32>} : memref<64x32xf32, #tpu.memory_space<vmem>>, vector<8x32xf32>,
    %c32_69 = arith.constant 32 : index
    %c128_70 = arith.constant 128 : index
    %271 = vector.load %arg11[%c32_69, %c128_70] : memref<64x256xf32, #tpu.memory_space<vmem>>, vector<8x128xf32>
    %272 = arith.truncf %269 : vector<8x32xf32> to vector<8x32xbf16>
    %cst_71 = arith.constant dense<0.000000e+00> : vector<8x128xf32>
    %273 = tpu.matmul %272, %185, %cst_71 {dimension_numbers = #tpu.dot_dimension_numbers<[1], [0], [0], [1], [0, 0, 1, 1], [], []>} : vector<8x32xbf16>, vector<32x128xbf16>, vector<8x128xf32> -> vector<8x128xf32>
    %274 = arith.addf %271, %273 : vector<8x128xf32>
    %275 = math.tanh %274 : vector<8x128xf32>
    %276 = arith.negf %274 : vector<8x128xf32>
    %277 = math.exp %276 : vector<8x128xf32>
    %cst_72 = arith.constant 1.000000e+00 : f32
    %278 = vector.broadcast %cst_72 : f32 to vector<8x128xf32>
    %279 = arith.addf %278, %277 : vector<8x128xf32>
    %280 = arith.divf %278, %279 : vector<8x128xf32>
    %281 = arith.select %12, %275, %280 : vector<8x128xi1>, vector<8x128xf32>
    %282 = vector.extract_strided_slice %281 {offsets = [0, 0], sizes = [8, 32], strides = [1, 1]} : vector<8x128xf32> to vector<8x32xf32>
    %283 = vector.extract_strided_slice %281 {offsets = [0, 32], sizes = [8, 32], strides = [1, 1]} : vector<8x128xf32> to vector<8x32xf32>
    %284 = vector.extract_strided_slice %281 {offsets = [0, 64], sizes = [8, 32], strides = [1, 1]} : vector<8x128xf32> to vector<8x32xf32>
    %285 = vector.extract_strided_slice %281 {offsets = [0, 96], sizes = [8, 32], strides = [1, 1]} : vector<8x128xf32> to vector<8x32xf32>
    %286 = arith.mulf %283, %267 : vector<8x32xf32>
    %287 = arith.mulf %282, %284 : vector<8x32xf32>
    %288 = arith.addf %286, %287 : vector<8x32xf32>
    %289 = math.tanh %288 : vector<8x32xf32>
    %290 = arith.mulf %285, %289 : vector<8x32xf32>
    %c32_73 = arith.constant 32 : index
    %c0_74 = arith.constant 0 : index
    %291 = vector.load %arg12[%c32_73, %c0_74] : memref<64x32xf32, #tpu.memory_space<vmem>>, vector<8x32xf32>
    tpu.vector_store %arg12[%c32_73, %c0_74], %290 {strides = array<i32>} : memref<64x32xf32, #tpu.memory_space<vmem>>, vector<8x32xf32>,
    %c40_75 = arith.constant 40 : index
    %c128_76 = arith.constant 128 : index
    %292 = vector.load %arg11[%c40_75, %c128_76] : memref<64x256xf32, #tpu.memory_space<vmem>>, vector<8x128xf32>
    %293 = arith.truncf %290 : vector<8x32xf32> to vector<8x32xbf16>
    %cst_77 = arith.constant dense<0.000000e+00> : vector<8x128xf32>
    %294 = tpu.matmul %293, %185, %cst_77 {dimension_numbers = #tpu.dot_dimension_numbers<[1], [0], [0], [1], [0, 0, 1, 1], [], []>} : vector<8x32xbf16>, vector<32x128xbf16>, vector<8x128xf32> -> vector<8x128xf32>
    %295 = arith.addf %292, %294 : vector<8x128xf32>
    %296 = math.tanh %295 : vector<8x128xf32>
    %297 = arith.negf %295 : vector<8x128xf32>
    %298 = math.exp %297 : vector<8x128xf32>
    %cst_78 = arith.constant 1.000000e+00 : f32
    %299 = vector.broadcast %cst_78 : f32 to vector<8x128xf32>
    %300 = arith.addf %299, %298 : vector<8x128xf32>
    %301 = arith.divf %299, %300 : vector<8x128xf32>
    %302 = arith.select %12, %296, %301 : vector<8x128xi1>, vector<8x128xf32>
    %303 = vector.extract_strided_slice %302 {offsets = [0, 0], sizes = [8, 32], strides = [1, 1]} : vector<8x128xf32> to vector<8x32xf32>
    %304 = vector.extract_strided_slice %302 {offsets = [0, 32], sizes = [8, 32], strides = [1, 1]} : vector<8x128xf32> to vector<8x32xf32>
    %305 = vector.extract_strided_slice %302 {offsets = [0, 64], sizes = [8, 32], strides = [1, 1]} : vector<8x128xf32> to vector<8x32xf32>
    %306 = vector.extract_strided_slice %302 {offsets = [0, 96], sizes = [8, 32], strides = [1, 1]} : vector<8x128xf32> to vector<8x32xf32>
    %307 = arith.mulf %304, %288 : vector<8x32xf32>
    %308 = arith.mulf %303, %305 : vector<8x32xf32>
    %309 = arith.addf %307, %308 : vector<8x32xf32>
    %310 = math.tanh %309 : vector<8x32xf32>
    %311 = arith.mulf %306, %310 : vector<8x32xf32>
    %c40_79 = arith.constant 40 : index
    %c0_80 = arith.constant 0 : index
    %312 = vector.load %arg12[%c40_79, %c0_80] : memref<64x32xf32, #tpu.memory_space<vmem>>, vector<8x32xf32>
    tpu.vector_store %arg12[%c40_79, %c0_80], %311 {strides = array<i32>} : memref<64x32xf32, #tpu.memory_space<vmem>>, vector<8x32xf32>,
    %c48_81 = arith.constant 48 : index
    %c128_82 = arith.constant 128 : index
    %313 = vector.load %arg11[%c48_81, %c128_82] : memref<64x256xf32, #tpu.memory_space<vmem>>, vector<8x128xf32>
    %314 = arith.truncf %311 : vector<8x32xf32> to vector<8x32xbf16>
    %cst_83 = arith.constant dense<0.000000e+00> : vector<8x128xf32>
    %315 = tpu.matmul %314, %185, %cst_83 {dimension_numbers = #tpu.dot_dimension_numbers<[1], [0], [0], [1], [0, 0, 1, 1], [], []>} : vector<8x32xbf16>, vector<32x128xbf16>, vector<8x128xf32> -> vector<8x128xf32>
    %316 = arith.addf %313, %315 : vector<8x128xf32>
    %317 = math.tanh %316 : vector<8x128xf32>
    %318 = arith.negf %316 : vector<8x128xf32>
    %319 = math.exp %318 : vector<8x128xf32>
    %cst_84 = arith.constant 1.000000e+00 : f32
    %320 = vector.broadcast %cst_84 : f32 to vector<8x128xf32>
    %321 = arith.addf %320, %319 : vector<8x128xf32>
    %322 = arith.divf %320, %321 : vector<8x128xf32>
    %323 = arith.select %12, %317, %322 : vector<8x128xi1>, vector<8x128xf32>
    %324 = vector.extract_strided_slice %323 {offsets = [0, 0], sizes = [8, 32], strides = [1, 1]} : vector<8x128xf32> to vector<8x32xf32>
    %325 = vector.extract_strided_slice %323 {offsets = [0, 32], sizes = [8, 32], strides = [1, 1]} : vector<8x128xf32> to vector<8x32xf32>
    %326 = vector.extract_strided_slice %323 {offsets = [0, 64], sizes = [8, 32], strides = [1, 1]} : vector<8x128xf32> to vector<8x32xf32>
    %327 = vector.extract_strided_slice %323 {offsets = [0, 96], sizes = [8, 32], strides = [1, 1]} : vector<8x128xf32> to vector<8x32xf32>
    %328 = arith.mulf %325, %309 : vector<8x32xf32>
    %329 = arith.mulf %324, %326 : vector<8x32xf32>
    %330 = arith.addf %328, %329 : vector<8x32xf32>
    %331 = math.tanh %330 : vector<8x32xf32>
    %332 = arith.mulf %327, %331 : vector<8x32xf32>
    %c48_85 = arith.constant 48 : index
    %c0_86 = arith.constant 0 : index
    %333 = vector.load %arg12[%c48_85, %c0_86] : memref<64x32xf32, #tpu.memory_space<vmem>>, vector<8x32xf32>
    tpu.vector_store %arg12[%c48_85, %c0_86], %332 {strides = array<i32>} : memref<64x32xf32, #tpu.memory_space<vmem>>, vector<8x32xf32>,
    %c56_87 = arith.constant 56 : index
    %c128_88 = arith.constant 128 : index
    %334 = vector.load %arg11[%c56_87, %c128_88] : memref<64x256xf32, #tpu.memory_space<vmem>>, vector<8x128xf32>
    %335 = arith.truncf %332 : vector<8x32xf32> to vector<8x32xbf16>
    %cst_89 = arith.constant dense<0.000000e+00> : vector<8x128xf32>
    %336 = tpu.matmul %335, %185, %cst_89 {dimension_numbers = #tpu.dot_dimension_numbers<[1], [0], [0], [1], [0, 0, 1, 1], [], []>} : vector<8x32xbf16>, vector<32x128xbf16>, vector<8x128xf32> -> vector<8x128xf32>
    %337 = arith.addf %334, %336 : vector<8x128xf32>
    %338 = math.tanh %337 : vector<8x128xf32>
    %339 = arith.negf %337 : vector<8x128xf32>
    %340 = math.exp %339 : vector<8x128xf32>
    %cst_90 = arith.constant 1.000000e+00 : f32
    %341 = vector.broadcast %cst_90 : f32 to vector<8x128xf32>
    %342 = arith.addf %341, %340 : vector<8x128xf32>
    %343 = arith.divf %341, %342 : vector<8x128xf32>
    %344 = arith.select %12, %338, %343 : vector<8x128xi1>, vector<8x128xf32>
    %345 = vector.extract_strided_slice %344 {offsets = [0, 0], sizes = [8, 32], strides = [1, 1]} : vector<8x128xf32> to vector<8x32xf32>
    %346 = vector.extract_strided_slice %344 {offsets = [0, 32], sizes = [8, 32], strides = [1, 1]} : vector<8x128xf32> to vector<8x32xf32>
    %347 = vector.extract_strided_slice %344 {offsets = [0, 64], sizes = [8, 32], strides = [1, 1]} : vector<8x128xf32> to vector<8x32xf32>
    %348 = vector.extract_strided_slice %344 {offsets = [0, 96], sizes = [8, 32], strides = [1, 1]} : vector<8x128xf32> to vector<8x32xf32>
    %349 = arith.mulf %346, %330 : vector<8x32xf32>
    %350 = arith.mulf %345, %347 : vector<8x32xf32>
    %351 = arith.addf %349, %350 : vector<8x32xf32>
    %352 = math.tanh %351 : vector<8x32xf32>
    %353 = arith.mulf %348, %352 : vector<8x32xf32>
    %c56_91 = arith.constant 56 : index
    %c0_92 = arith.constant 0 : index
    %354 = vector.load %arg12[%c56_91, %c0_92] : memref<64x32xf32, #tpu.memory_space<vmem>>, vector<8x32xf32>
    tpu.vector_store %arg12[%c56_91, %c0_92], %353 {strides = array<i32>} : memref<64x32xf32, #tpu.memory_space<vmem>>, vector<8x32xf32>,
    %c0_93 = arith.constant 0 : index
    %c0_94 = arith.constant 0 : index
    %355 = vector.load %arg12[%c0_93, %c0_94] : memref<64x32xf32, #tpu.memory_space<vmem>>, vector<64x32xf32>
    %356 = arith.truncf %355 : vector<64x32xf32> to vector<64x32xbf16>
    %c0_95 = arith.constant 0 : index
    %c0_96 = arith.constant 0 : index
    %357 = vector.load %arg7[%c0_95, %c0_96] : memref<32x128xbf16, #tpu.memory_space<vmem>>, vector<32x128xbf16>
    %cst_97 = arith.constant dense<0.000000e+00> : vector<64x128xf32>
    %358 = tpu.matmul %356, %357, %cst_97 {dimension_numbers = #tpu.dot_dimension_numbers<[1], [0], [0], [1], [0, 0, 1, 1], [], []>} : vector<64x32xbf16>, vector<32x128xbf16>, vector<64x128xf32> -> vector<64x128xf32>
    %c0_98 = arith.constant 0 : index
    %c0_99 = arith.constant 0 : index
    %359 = vector.load %arg8[%c0_98, %c0_99] : memref<1x128xf32, #tpu.memory_space<vmem>>, vector<1x128xf32>
    %360 = vector.broadcast %359 : vector<1x128xf32> to vector<64x128xf32>
    %361 = arith.addf %358, %360 : vector<64x128xf32>
    %c0_100 = arith.constant 0 : index
    %c0_101 = arith.constant 0 : index
    %362 = vector.load %arg9[%c0_100, %c0_101] : memref<64x128xf32, #tpu.memory_space<vmem>>, vector<64x128xf32>
    tpu.vector_store %arg9[%c0_100, %c0_101], %361 {strides = array<i32>} : memref<64x128xf32, #tpu.memory_space<vmem>>, vector<64x128xf32>,
    return
  }
}

</mosaic_0001>

<llo_original>
// kernel: bvae_lstm_forward.1
$region0: #{bvae_lstm_forward.1}
  #allocation0 [shape = 'u32[]', space=smem, size = 0x4, offset = 0x4, fixed_abs, tag = 'smem constant byte address 0x4 - core index']
  #allocation1 [shape = 'u32[144,128]{1,0:T(1,128)}', space=vmem, size = 0x12000, scoped, tag = 'internal scratch']
  #allocation2 [shape = 'f32[64,256]{1,0:T(8,128)}', space=vmem, size = 0x10000, scoped, tag = 'scratch operand']
  #allocation3 [shape = 'f32[64,32]{1,0:T(8,128)}', space=vmem, size = 0x8000, scoped, tag = 'scratch operand']
  %s0 = inlined_call_operand.vmem [shape: bf16[64,16], index: 0, kind: input, shape index: {}]
  %s1 = inlined_call_operand.vmem [shape: bf16[16,256], index: 1, kind: input, shape index: {}]
  %s2 = inlined_call_operand.vmem [shape: f32[1,256], index: 2, kind: input, shape index: {}]
  %s3 = inlined_call_operand.vmem [shape: bf16[32,128], index: 3, kind: input, shape index: {}]
  %s4 = inlined_call_operand.vmem [shape: bf16[32,128], index: 4, kind: input, shape index: {}]
  %s5 = inlined_call_operand.vmem [shape: bf16[32,384], index: 5, kind: input, shape index: {}]
  %s6 = inlined_call_operand.vmem [shape: f32[1,384], index: 6, kind: input, shape index: {}]
  %s7 = inlined_call_operand.vmem [shape: bf16[32,128], index: 7, kind: input, shape index: {}]
  %s8 = inlined_call_operand.vmem [shape: f32[1,128], index: 8, kind: input, shape index: {}]
  %s9 = inlined_call_operand.vmem [shape: f32[64,128], index: 9, kind: output, shape index: {0}]
  %s10 = inlined_call_operand.vmem [shape: f32[8,256], index: 10, kind: output, shape index: {1}]
  %11 = xla_tuple %s9, %s10
  %s12 = sld [smem:[#allocation0]]
  $region54: #{bvae_lstm_forward.1} parent=0
    _
  %s14 = ssub.s32 1, %s12
  %s15 = scalar_select 0, %s14, %s12
  // Predicated region
  $region2: #{bvae_lstm_forward.1} parent=0 // pred_check
    _
  $region3: #{bvae_lstm_forward.1} parent=0 // pred_check_branch
    %17 = sbr.rel (0) target = $region5
  $region4: #{bvae_lstm_forward.1} parent=0 // pred_region
    _
  $region5: #{bvae_lstm_forward.1} parent=0 // pred_fallthru
    _
  // Predicated region
  $region6: #{bvae_lstm_forward.1} parent=0 // pred_check
    _
  $region7: #{bvae_lstm_forward.1} parent=0 // pred_check_branch
    %19 = sbr.rel (0) target = $region9
  $region8: #{bvae_lstm_forward.1} parent=0 // pred_region
    _
  $region9: #{bvae_lstm_forward.1} parent=0 // pred_fallthru
    _
  // Predicated region
  $region10: #{bvae_lstm_forward.1} parent=0 // pred_check
    _
  $region11: #{bvae_lstm_forward.1} parent=0 // pred_check_branch
    %21 = sbr.rel (0) target = $region13
  $region12: #{bvae_lstm_forward.1} parent=0 // pred_region
    _
  $region13: #{bvae_lstm_forward.1} parent=0 // pred_fallthru
    _
  // Predicated region
  $region14: #{bvae_lstm_forward.1} parent=0 // pred_check
    _
  $region15: #{bvae_lstm_forward.1} parent=0 // pred_check_branch
    %23 = sbr.rel (0) target = $region17
  $region16: #{bvae_lstm_forward.1} parent=0 // pred_region
    _
  $region17: #{bvae_lstm_forward.1} parent=0 // pred_fallthru
    _
  // Predicated region
  $region18: #{bvae_lstm_forward.1} parent=0 // pred_check
    _
  $region19: #{bvae_lstm_forward.1} parent=0 // pred_check_branch
    %25 = sbr.rel (0) target = $region21
  $region20: #{bvae_lstm_forward.1} parent=0 // pred_region
    _
  $region21: #{bvae_lstm_forward.1} parent=0 // pred_fallthru
    _
  // Predicated region
  $region22: #{bvae_lstm_forward.1} parent=0 // pred_check
    _
  $region23: #{bvae_lstm_forward.1} parent=0 // pred_check_branch
    %27 = sbr.rel (0) target = $region25
  $region24: #{bvae_lstm_forward.1} parent=0 // pred_region
    _
  $region25: #{bvae_lstm_forward.1} parent=0 // pred_fallthru
    _
  // Predicated region
  $region26: #{bvae_lstm_forward.1} parent=0 // pred_check
    _
  $region27: #{bvae_lstm_forward.1} parent=0 // pred_check_branch
    %29 = sbr.rel (0) target = $region29
  $region28: #{bvae_lstm_forward.1} parent=0 // pred_region
    _
  $region29: #{bvae_lstm_forward.1} parent=0 // pred_fallthru
    _
  // Predicated region
  $region30: #{bvae_lstm_forward.1} parent=0 // pred_check
    _
  $region31: #{bvae_lstm_forward.1} parent=0 // pred_check_branch
    %31 = sbr.rel (0) target = $region33
  $region32: #{bvae_lstm_forward.1} parent=0 // pred_region
    _
  $region33: #{bvae_lstm_forward.1} parent=0 // pred_fallthru
    _
  // Predicated region
  $region34: #{bvae_lstm_forward.1} parent=0 // pred_check
    _
  $region35: #{bvae_lstm_forward.1} parent=0 // pred_check_branch
    %33 = sbr.rel (0) target = $region37
  $region36: #{bvae_lstm_forward.1} parent=0 // pred_region
    _
  $region37: #{bvae_lstm_forward.1} parent=0 // pred_fallthru
    _
  %v35 = vld [vmem:[%s0] sm:$0xf]
  %v36 = vld [vmem:[%s0 + $0x4] sm:$0xf]
  %v37 = vld [vmem:[%s0 + $0x8] sm:$0xf]
  %v38 = vld [vmem:[%s0 + $0xc] sm:$0xf]
  %v39 = vld [vmem:[%s0 + $0x10] sm:$0xf]
  %v40 = vld [vmem:[%s0 + $0x14] sm:$0xf]
  %v41 = vld [vmem:[%s0 + $0x18] sm:$0xf]
  %v42 = vld [vmem:[%s0 + $0x1c] sm:$0xf]
  %v43 = vld [vmem:[%s1] sm:$0xff]
  %v44 = vld [vmem:[%s1 + $0x8] sm:$0xff]
  %v45 = vld [vmem:[%s2] sm:$0x3]
  %v47 = vlaneseq
  %v48 = vshrl.u32 %v47, 7
  %v49 = vsub.s32 0, %v48
  %v50 = vrot.slane %v45, %v49
  %v51 = vlaneseq
  %v52 = vshrl.u32 %v51, 7
  %v53 = vsub.s32 1, %v52
  %v54 = vrot.slane %v45, %v53
  %v65 = vunpack.c.l.b16 %v35
  %v66 = vunpack.c.l.b16 %v36
  %v67 = vunpack.c.l.b16 %v37
  %v68 = vunpack.c.l.b16 %v38
  %v69 = vunpack.c.l.b16 %v39
  %v70 = vunpack.c.l.b16 %v40
  %v71 = vunpack.c.l.b16 %v41
  %v72 = vunpack.c.l.b16 %v42
  %v73 = vpack.c.b16 %v66, %v65
  %v74 = vpack.c.b16 %v68, %v67
  %v75 = vpack.c.b16 %v70, %v69
  %v76 = vpack.c.b16 %v72, %v71
  %v79 = vunpack.c.l.b16 %v43
  %v80 = vunpack.c.h.b16 %v43
  %v81 = vunpack.c.l.b16 %v44
  %v82 = vunpack.c.h.b16 %v44
  %v83 = vpack.c.b16 %v81, %v79
  %v84 = vpack.c.b16 %v82, %v80
  %vm87 = vcmask 130048
  %v89 = vsel %vm87, %v73, 0
  %v92 = vsel %vm87, %v74, 0
  %v95 = vsel %vm87, %v75, 0
  %v98 = vsel %vm87, %v76, 0
  %100 = vmatprep.subr.bf16.mxu0 %v84
  %101 = vmatpush1.bf16.msra.mxu0 %v83
  %102 = vmatprep.subr.bf16.mxu0 0
  %103 = vmatpush1.bf16.msra.mxu0 0
  %104 = vmatprep.subr.bf16.mxu0 0
  %105 = vmatpush1.bf16.msra.mxu0 0
  %106 = vmatprep.subr.bf16.mxu0 0
  %107 = vmatpush1.bf16.msra.mxu0 0
  %108 = vmatprep.subr.bf16.mxu0 0
  %109 = vmatpush1.bf16.msra.mxu0 0
  %110 = vmatprep.subr.bf16.mxu0 0
  %111 = vmatpush1.bf16.msra.mxu0 0
  %112 = vmatprep.subr.bf16.mxu0 0
  %113 = vmatpush1.bf16.msra.mxu0 0
  %114 = vmatprep.subr.bf16.mxu0 0
  %115 = vmatpush1.bf16.msra.mxu0 0
  %116 = vmatprep.subr.bf16.mxu0 0
  %117 = vmatpush1.bf16.msra.mxu0 0
  %118 = vmatprep.subr.bf16.mxu0 0
  %119 = vmatpush1.bf16.msra.mxu0 0
  %120 = vmatprep.subr.bf16.mxu0 0
  %121 = vmatpush1.bf16.msra.mxu0 0
  %122 = vmatprep.subr.bf16.mxu0 0
  %123 = vmatpush1.bf16.msra.mxu0 0
  %124 = vmatprep.subr.bf16.mxu0 0
  %125 = vmatpush1.bf16.msra.mxu0 0
  %126 = vmatprep.subr.bf16.mxu0 0
  %127 = vmatpush1.bf16.msra.mxu0 0
  %128 = vmatprep.subr.bf16.mxu0 0
  %129 = vmatpush1.bf16.msra.mxu0 0
  %130 = vmatprep.subr.bf16.mxu0 0
  %131 = vmatpush1.bf16.msra.mxu0 0
  %132 = vmatprep.mubr.bf16.mxu0 0
  %133 = vmatmul.mubr.bf16.gmra.mrb[0].mxu0 %v89
  %v134 = vpop.f32.mrb[0].mxu0
  %v135 = vadd.f32 %v50, %v134
  %v136 = vpop.f32.mrb[0].mxu0
  %v137 = vadd.f32 %v54, %v136
  %v138 = vpop.f32.mrb[0].mxu0
  %v139 = vadd.f32 %v50, %v138
  %v140 = vpop.f32.mrb[0].mxu0
  %v141 = vadd.f32 %v54, %v140
  %142 = vmatprep.mubr.bf16.mxu0 0
  %143 = vmatmul.mubr.bf16.gmra.mrb[0].mxu0 %v92
  %v144 = vpop.f32.mrb[0].mxu0
  %v145 = vadd.f32 %v50, %v144
  %v146 = vpop.f32.mrb[0].mxu0
  %v147 = vadd.f32 %v54, %v146
  %v148 = vpop.f32.mrb[0].mxu0
  %v149 = vadd.f32 %v50, %v148
  %v150 = vpop.f32.mrb[0].mxu0
  %v151 = vadd.f32 %v54, %v150
  %152 = vmatprep.mubr.bf16.mxu0 0
  %153 = vmatmul.mubr.bf16.gmra.mrb[0].mxu0 %v95
  %v154 = vpop.f32.mrb[0].mxu0
  %v155 = vadd.f32 %v50, %v154
  %v156 = vpop.f32.mrb[0].mxu0
  %v157 = vadd.f32 %v54, %v156
  %v158 = vpop.f32.mrb[0].mxu0
  %v159 = vadd.f32 %v50, %v158
  %v160 = vpop.f32.mrb[0].mxu0
  %v161 = vadd.f32 %v54, %v160
  %162 = vmatprep.mubr.bf16.mxu0 0
  %163 = vmatmul.mubr.bf16.gmra.mrb[0].mxu0 %v98
  %v164 = vpop.f32.mrb[0].mxu0
  %v165 = vadd.f32 %v50, %v164
  %v166 = vpop.f32.mrb[0].mxu0
  %v167 = vadd.f32 %v54, %v166
  %v168 = vpop.f32.mrb[0].mxu0
  %v169 = vadd.f32 %v50, %v168
  %v170 = vpop.f32.mrb[0].mxu0
  %v171 = vadd.f32 %v54, %v170
  %172 = vdwg.mxu0
  %173 = vst [vmem:[#allocation2] sm:$0xff] %v135
  %174 = vst [vmem:[#allocation2 + $0x8] sm:$0xff] %v137
  %175 = vst [vmem:[#allocation2 + $0x10] sm:$0xff] %v139
  %176 = vst [vmem:[#allocation2 + $0x18] sm:$0xff] %v141
  %177 = vst [vmem:[#allocation2 + $0x20] sm:$0xff] %v145
  %178 = vst [vmem:[#allocation2 + $0x28] sm:$0xff] %v147
  %179 = vst [vmem:[#allocation2 + $0x30] sm:$0xff] %v149
  %180 = vst [vmem:[#allocation2 + $0x38] sm:$0xff] %v151
  %181 = vst [vmem:[#allocation2 + $0x40] sm:$0xff] %v155
  %182 = vst [vmem:[#allocation2 + $0x48] sm:$0xff] %v157
  %183 = vst [vmem:[#allocation2 + $0x50] sm:$0xff] %v159
  %184 = vst [vmem:[#allocation2 + $0x58] sm:$0xff] %v161
  %185 = vst [vmem:[#allocation2 + $0x60] sm:$0xff] %v165
  %186 = vst [vmem:[#allocation2 + $0x68] sm:$0xff] %v167
  %187 = vst [vmem:[#allocation2 + $0x70] sm:$0xff] %v169
  %188 = vst [vmem:[#allocation2 + $0x78] sm:$0xff] %v171
  %v189 = vlaneseq
  %v190 = vand.u32 %v189, 127
  %vm191 = vcmp.ge.s32.totalorder %v190, 64
  %vm192 = vcmp.lt.s32.totalorder %v190, 96
  %vm193 = vmand %vm191, %vm192
  %v194 = vld [vmem:[%s3] sm:$0xf]
  %v195 = vld [vmem:[%s3 + $0x4] sm:$0xf]
  %v196 = vld [vmem:[%s3 + $0x8] sm:$0xf]
  %v197 = vld [vmem:[%s3 + $0xc] sm:$0xf]
  %v198 = vld [vmem:[#allocation2] sm:$0xff]
  %v203 = vunpack.c.l.b16 %v194
  %v204 = vunpack.c.l.b16 %v195
  %v205 = vunpack.c.l.b16 %v196
  %v206 = vunpack.c.l.b16 %v197
  %v207 = vpack.c.b16 %v204, %v203
  %v208 = vpack.c.b16 %v206, %v205
  %vm211 = vcmask 261120
  %v213 = vsel %vm211, 0, 0
  %215 = vmatprep.subr.bf16.mxu0 0
  %216 = vmatpush1.bf16.msra.mxu0 %v207
  %217 = vmatprep.subr.bf16.mxu0 0
  %218 = vmatpush1.bf16.msra.mxu0 %v208
  %219 = vmatprep.subr.bf16.mxu0 0
  %220 = vmatpush1.bf16.msra.mxu0 0
  %221 = vmatprep.subr.bf16.mxu0 0
  %222 = vmatpush1.bf16.msra.mxu0 0
  %223 = vmatprep.subr.bf16.mxu0 0
  %224 = vmatpush1.bf16.msra.mxu0 0
  %225 = vmatprep.subr.bf16.mxu0 0
  %226 = vmatpush1.bf16.msra.mxu0 0
  %227 = vmatprep.subr.bf16.mxu0 0
  %228 = vmatpush1.bf16.msra.mxu0 0
  %229 = vmatprep.subr.bf16.mxu0 0
  %230 = vmatpush1.bf16.msra.mxu0 0
  %231 = vmatprep.subr.bf16.mxu0 0
  %232 = vmatpush1.bf16.msra.mxu0 0
  %233 = vmatprep.subr.bf16.mxu0 0
  %234 = vmatpush1.bf16.msra.mxu0 0
  %235 = vmatprep.subr.bf16.mxu0 0
  %236 = vmatpush1.bf16.msra.mxu0 0
  %237 = vmatprep.subr.bf16.mxu0 0
  %238 = vmatpush1.bf16.msra.mxu0 0
  %239 = vmatprep.subr.bf16.mxu0 0
  %240 = vmatpush1.bf16.msra.mxu0 0
  %241 = vmatprep.subr.bf16.mxu0 0
  %242 = vmatpush1.bf16.msra.mxu0 0
  %243 = vmatprep.subr.bf16.mxu0 0
  %244 = vmatpush1.bf16.msra.mxu0 0
  %245 = vmatprep.subr.bf16.mxu0 0
  %246 = vmatpush1.bf16.msra.mxu0 0
  %247 = vmatprep.mubr.bf16.mxu0 0
  %248 = vmatmul.mubr.bf16.gmra.mrb[0].mxu0 %v213
  %v249 = vpop.f32.mrb[0].mxu0
  %v250 = vadd.f32 0.0, %v249
  %v251 = vpop.f32.mrb[0].mxu0
  %v252 = vpop.f32.mrb[0].mxu0
  %v253 = vpop.f32.mrb[0].mxu0
  %254 = vdwg.mxu0
  %v255 = vadd.f32 %v198, %v250
  %v256 = vtanh.pop %v255
  %v257 = vxor.u32 %v255, 2147483648
  %v258 = vmul.f32 %v257, 1.442695
  %v259 = vpow.pop %v258
  %v260 = vadd.f32 %v259, 1.0
  %v261 = vrcp.pop %v260
  %v262 = vmul.f32 1.0, %v261
  %v263 = vsel %vm193, %v256, %v262
  %v264 = vmul.f32 %v263, 0.0
  %266 = vrot.lane.b32.xlu0 %v263, 64
  %v267 = vpop.permute.xlu0 %266
  %v269 = vmul.f32 %v263, %v267
  %271 = vrot.lane.b32.xlu0 %v269, 32
  %v272 = vpop.permute.xlu0 %271
  %v274 = vadd.f32 %v264, %v272
  %v275 = vtanh.pop %v274
  %277 = vrot.lane.b32.xlu0 %v275, 64
  %v278 = vpop.permute.xlu0 %277
  %v280 = vmul.f32 %v263, %v278
  %v281 = vld [vmem:[#allocation2 + $0x10] sm:$0xff]
  %v282 = vpack.c.bf16 %v280, %v280
  %284 = vrot.lane.b32.xlu0 %v282, 32
  %v285 = vpop.permute.xlu0 %284
  %v287 = vsel %vm211, %v285, 0
  %289 = vmatprep.subr.bf16.mxu0 0
  %290 = vmatpush1.bf16.msra.mxu0 %v207
  %291 = vmatprep.subr.bf16.mxu0 0
  %292 = vmatpush1.bf16.msra.mxu0 %v208
  %293 = vmatprep.subr.bf16.mxu0 0
  %294 = vmatpush1.bf16.msra.mxu0 0
  %295 = vmatprep.subr.bf16.mxu0 0
  %296 = vmatpush1.bf16.msra.mxu0 0
  %297 = vmatprep.subr.bf16.mxu0 0
  %298 = vmatpush1.bf16.msra.mxu0 0
  %299 = vmatprep.subr.bf16.mxu0 0
  %300 = vmatpush1.bf16.msra.mxu0 0
  %301 = vmatprep.subr.bf16.mxu0 0
  %302 = vmatpush1.bf16.msra.mxu0 0
  %303 = vmatprep.subr.bf16.mxu0 0
  %304 = vmatpush1.bf16.msra.mxu0 0
  %305 = vmatprep.subr.bf16.mxu0 0
  %306 = vmatpush1.bf16.msra.mxu0 0
  %307 = vmatprep.subr.bf16.mxu0 0
  %308 = vmatpush1.bf16.msra.mxu0 0
  %309 = vmatprep.subr.bf16.mxu0 0
  %310 = vmatpush1.bf16.msra.mxu0 0
  %311 = vmatprep.subr.bf16.mxu0 0
  %312 = vmatpush1.bf16.msra.mxu0 0
  %313 = vmatprep.subr.bf16.mxu0 0
  %314 = vmatpush1.bf16.msra.mxu0 0
  %315 = vmatprep.subr.bf16.mxu0 0
  %316 = vmatpush1.bf16.msra.mxu0 0
  %317 = vmatprep.subr.bf16.mxu0 0
  %318 = vmatpush1.bf16.msra.mxu0 0
  %319 = vmatprep.subr.bf16.mxu0 0
  %320 = vmatpush1.bf16.msra.mxu0 0
  %321 = vmatprep.mubr.bf16.mxu0 0
  %322 = vmatmul.mubr.bf16.gmra.mrb[0].mxu0 %v287
  %v323 = vpop.f32.mrb[0].mxu0
  %v324 = vadd.f32 0.0, %v323
  %v325 = vpop.f32.mrb[0].mxu0
  %v326 = vpop.f32.mrb[0].mxu0
  %v327 = vpop.f32.mrb[0].mxu0
  %328 = vdwg.mxu0
  %v329 = vadd.f32 %v281, %v324
  %v330 = vtanh.pop %v329
  %v331 = vxor.u32 %v329, 2147483648
  %v332 = vmul.f32 %v331, 1.442695
  %v333 = vpow.pop %v332
  %v334 = vadd.f32 %v333, 1.0
  %v335 = vrcp.pop %v334
  %v336 = vmul.f32 1.0, %v335
  %v337 = vsel %vm193, %v330, %v336
  %v338 = vmul.f32 %v337, %v274
  %340 = vrot.lane.b32.xlu0 %v337, 64
  %v341 = vpop.permute.xlu0 %340
  %v343 = vmul.f32 %v337, %v341
  %345 = vrot.lane.b32.xlu0 %v343, 32
  %v346 = vpop.permute.xlu0 %345
  %v348 = vadd.f32 %v338, %v346
  %v349 = vtanh.pop %v348
  %351 = vrot.lane.b32.xlu0 %v349, 64
  %v352 = vpop.permute.xlu0 %351
  %v354 = vmul.f32 %v337, %v352
  %v355 = vld [vmem:[#allocation2 + $0x20] sm:$0xff]
  %v356 = vpack.c.bf16 %v354, %v354
  %358 = vrot.lane.b32.xlu0 %v356, 32
  %v359 = vpop.permute.xlu0 %358
  %v361 = vsel %vm211, %v359, 0
  %363 = vmatprep.subr.bf16.mxu0 0
  %364 = vmatpush1.bf16.msra.mxu0 %v207
  %365 = vmatprep.subr.bf16.mxu0 0
  %366 = vmatpush1.bf16.msra.mxu0 %v208
  %367 = vmatprep.subr.bf16.mxu0 0
  %368 = vmatpush1.bf16.msra.mxu0 0
  %369 = vmatprep.subr.bf16.mxu0 0
  %370 = vmatpush1.bf16.msra.mxu0 0
  %371 = vmatprep.subr.bf16.mxu0 0
  %372 = vmatpush1.bf16.msra.mxu0 0
  %373 = vmatprep.subr.bf16.mxu0 0
  %374 = vmatpush1.bf16.msra.mxu0 0
  %375 = vmatprep.subr.bf16.mxu0 0
  %376 = vmatpush1.bf16.msra.mxu0 0
  %377 = vmatprep.subr.bf16.mxu0 0
  %378 = vmatpush1.bf16.msra.mxu0 0
  %379 = vmatprep.subr.bf16.mxu0 0
  %380 = vmatpush1.bf16.msra.mxu0 0
  %381 = vmatprep.subr.bf16.mxu0 0
  %382 = vmatpush1.bf16.msra.mxu0 0
  %383 = vmatprep.subr.bf16.mxu0 0
  %384 = vmatpush1.bf16.msra.mxu0 0
  %385 = vmatprep.subr.bf16.mxu0 0
  %386 = vmatpush1.bf16.msra.mxu0 0
  %387 = vmatprep.subr.bf16.mxu0 0
  %388 = vmatpush1.bf16.msra.mxu0 0
  %389 = vmatprep.subr.bf16.mxu0 0
  %390 = vmatpush1.bf16.msra.mxu0 0
  %391 = vmatprep.subr.bf16.mxu0 0
  %392 = vmatpush1.bf16.msra.mxu0 0
  %393 = vmatprep.subr.bf16.mxu0 0
  %394 = vmatpush1.bf16.msra.mxu0 0
  %395 = vmatprep.mubr.bf16.mxu0 0
  %396 = vmatmul.mubr.bf16.gmra.mrb[0].mxu0 %v361
  %v397 = vpop.f32.mrb[0].mxu0
  %v398 = vadd.f32 0.0, %v397
  %v399 = vpop.f32.mrb[0].mxu0
  %v400 = vpop.f32.mrb[0].mxu0
  %v401 = vpop.f32.mrb[0].mxu0
  %402 = vdwg.mxu0
  %v403 = vadd.f32 %v355, %v398
  %v404 = vtanh.pop %v403
  %v405 = vxor.u32 %v403, 2147483648
  %v406 = vmul.f32 %v405, 1.442695
  %v407 = vpow.pop %v406
  %v408 = vadd.f32 %v407, 1.0
  %v409 = vrcp.pop %v408
  %v410 = vmul.f32 1.0, %v409
  %v411 = vsel %vm193, %v404, %v410
  %v412 = vmul.f32 %v411, %v348
  %414 = vrot.lane.b32.xlu0 %v411, 64
  %v415 = vpop.permute.xlu0 %414
  %v417 = vmul.f32 %v411, %v415
  %419 = vrot.lane.b32.xlu0 %v417, 32
  %v420 = vpop.permute.xlu0 %419
  %v422 = vadd.f32 %v412, %v420
  %v423 = vtanh.pop %v422
  %425 = vrot.lane.b32.xlu0 %v423, 64
  %v426 = vpop.permute.xlu0 %425
  %v428 = vmul.f32 %v411, %v426
  %v429 = vld [vmem:[#allocation2 + $0x30] sm:$0xff]
  %v430 = vpack.c.bf16 %v428, %v428
  %432 = vrot.lane.b32.xlu0 %v430, 32
  %v433 = vpop.permute.xlu0 %432
  %v435 = vsel %vm211, %v433, 0
  %437 = vmatprep.subr.bf16.mxu0 0
  %438 = vmatpush1.bf16.msra.mxu0 %v207
  %439 = vmatprep.subr.bf16.mxu0 0
  %440 = vmatpush1.bf16.msra.mxu0 %v208
  %441 = vmatprep.subr.bf16.mxu0 0
  %442 = vmatpush1.bf16.msra.mxu0 0
  %443 = vmatprep.subr.bf16.mxu0 0
  %444 = vmatpush1.bf16.msra.mxu0 0
  %445 = vmatprep.subr.bf16.mxu0 0
  %446 = vmatpush1.bf16.msra.mxu0 0
  %447 = vmatprep.subr.bf16.mxu0 0
  %448 = vmatpush1.bf16.msra.mxu0 0
  %449 = vmatprep.subr.bf16.mxu0 0
  %450 = vmatpush1.bf16.msra.mxu0 0
  %451 = vmatprep.subr.bf16.mxu0 0
  %452 = vmatpush1.bf16.msra.mxu0 0
  %453 = vmatprep.subr.bf16.mxu0 0
  %454 = vmatpush1.bf16.msra.mxu0 0
  %455 = vmatprep.subr.bf16.mxu0 0
  %456 = vmatpush1.bf16.msra.mxu0 0
  %457 = vmatprep.subr.bf16.mxu0 0
  %458 = vmatpush1.bf16.msra.mxu0 0
  %459 = vmatprep.subr.bf16.mxu0 0
  %460 = vmatpush1.bf16.msra.mxu0 0
  %461 = vmatprep.subr.bf16.mxu0 0
  %462 = vmatpush1.bf16.msra.mxu0 0
  %463 = vmatprep.subr.bf16.mxu0 0
  %464 = vmatpush1.bf16.msra.mxu0 0
  %465 = vmatprep.subr.bf16.mxu0 0
  %466 = vmatpush1.bf16.msra.mxu0 0
  %467 = vmatprep.subr.bf16.mxu0 0
  %468 = vmatpush1.bf16.msra.mxu0 0
  %469 = vmatprep.mubr.bf16.mxu0 0
  %470 = vmatmul.mubr.bf16.gmra.mrb[0].mxu0 %v435
  %v471 = vpop.f32.mrb[0].mxu0
  %v472 = vadd.f32 0.0, %v471
  %v473 = vpop.f32.mrb[0].mxu0
  %v474 = vpop.f32.mrb[0].mxu0
  %v475 = vpop.f32.mrb[0].mxu0
  %476 = vdwg.mxu0
  %v477 = vadd.f32 %v429, %v472
  %v478 = vtanh.pop %v477
  %v479 = vxor.u32 %v477, 2147483648
  %v480 = vmul.f32 %v479, 1.442695
  %v481 = vpow.pop %v480
  %v482 = vadd.f32 %v481, 1.0
  %v483 = vrcp.pop %v482
  %v484 = vmul.f32 1.0, %v483
  %v485 = vsel %vm193, %v478, %v484
  %v486 = vmul.f32 %v485, %v422
  %488 = vrot.lane.b32.xlu0 %v485, 64
  %v489 = vpop.permute.xlu0 %488
  %v491 = vmul.f32 %v485, %v489
  %493 = vrot.lane.b32.xlu0 %v491, 32
  %v494 = vpop.permute.xlu0 %493
  %v496 = vadd.f32 %v486, %v494
  %v497 = vtanh.pop %v496
  %499 = vrot.lane.b32.xlu0 %v497, 64
  %v500 = vpop.permute.xlu0 %499
  %v502 = vmul.f32 %v485, %v500
  %v503 = vld [vmem:[#allocation2 + $0x40] sm:$0xff]
  %v504 = vpack.c.bf16 %v502, %v502
  %506 = vrot.lane.b32.xlu0 %v504, 32
  %v507 = vpop.permute.xlu0 %506
  %v509 = vsel %vm211, %v507, 0
  %511 = vmatprep.subr.bf16.mxu0 0
  %512 = vmatpush1.bf16.msra.mxu0 %v207
  %513 = vmatprep.subr.bf16.mxu0 0
  %514 = vmatpush1.bf16.msra.mxu0 %v208
  %515 = vmatprep.subr.bf16.mxu0 0
  %516 = vmatpush1.bf16.msra.mxu0 0
  %517 = vmatprep.subr.bf16.mxu0 0
  %518 = vmatpush1.bf16.msra.mxu0 0
  %519 = vmatprep.subr.bf16.mxu0 0
  %520 = vmatpush1.bf16.msra.mxu0 0
  %521 = vmatprep.subr.bf16.mxu0 0
  %522 = vmatpush1.bf16.msra.mxu0 0
  %523 = vmatprep.subr.bf16.mxu0 0
  %524 = vmatpush1.bf16.msra.mxu0 0
  %525 = vmatprep.subr.bf16.mxu0 0
  %526 = vmatpush1.bf16.msra.mxu0 0
  %527 = vmatprep.subr.bf16.mxu0 0
  %528 = vmatpush1.bf16.msra.mxu0 0
  %529 = vmatprep.subr.bf16.mxu0 0
  %530 = vmatpush1.bf16.msra.mxu0 0
  %531 = vmatprep.subr.bf16.mxu0 0
  %532 = vmatpush1.bf16.msra.mxu0 0
  %533 = vmatprep.subr.bf16.mxu0 0
  %534 = vmatpush1.bf16.msra.mxu0 0
  %535 = vmatprep.subr.bf16.mxu0 0
  %536 = vmatpush1.bf16.msra.mxu0 0
  %537 = vmatprep.subr.bf16.mxu0 0
  %538 = vmatpush1.bf16.msra.mxu0 0
  %539 = vmatprep.subr.bf16.mxu0 0
  %540 = vmatpush1.bf16.msra.mxu0 0
  %541 = vmatprep.subr.bf16.mxu0 0
  %542 = vmatpush1.bf16.msra.mxu0 0
  %543 = vmatprep.mubr.bf16.mxu0 0
  %544 = vmatmul.mubr.bf16.gmra.mrb[0].mxu0 %v509
  %v545 = vpop.f32.mrb[0].mxu0
  %v546 = vadd.f32 0.0, %v545
  %v547 = vpop.f32.mrb[0].mxu0
  %v548 = vpop.f32.mrb[0].mxu0
  %v549 = vpop.f32.mrb[0].mxu0
  %550 = vdwg.mxu0
  %v551 = vadd.f32 %v503, %v546
  %v552 = vtanh.pop %v551
  %v553 = vxor.u32 %v551, 2147483648
  %v554 = vmul.f32 %v553, 1.442695
  %v555 = vpow.pop %v554
  %v556 = vadd.f32 %v555, 1.0
  %v557 = vrcp.pop %v556
  %v558 = vmul.f32 1.0, %v557
  %v559 = vsel %vm193, %v552, %v558
  %v560 = vmul.f32 %v559, %v496
  %562 = vrot.lane.b32.xlu0 %v559, 64
  %v563 = vpop.permute.xlu0 %562
  %v565 = vmul.f32 %v559, %v563
  %567 = vrot.lane.b32.xlu0 %v565, 32
  %v568 = vpop.permute.xlu0 %567
  %v570 = vadd.f32 %v560, %v568
  %v571 = vtanh.pop %v570
  %573 = vrot.lane.b32.xlu0 %v571, 64
  %v574 = vpop.permute.xlu0 %573
  %v576 = vmul.f32 %v559, %v574
  %v577 = vld [vmem:[#allocation2 + $0x50] sm:$0xff]
  %v578 = vpack.c.bf16 %v576, %v576
  %580 = vrot.lane.b32.xlu0 %v578, 32
  %v581 = vpop.permute.xlu0 %580
  %v583 = vsel %vm211, %v581, 0
  %585 = vmatprep.subr.bf16.mxu0 0
  %586 = vmatpush1.bf16.msra.mxu0 %v207
  %587 = vmatprep.subr.bf16.mxu0 0
  %588 = vmatpush1.bf16.msra.mxu0 %v208
  %589 = vmatprep.subr.bf16.mxu0 0
  %590 = vmatpush1.bf16.msra.mxu0 0
  %591 = vmatprep.subr.bf16.mxu0 0
  %592 = vmatpush1.bf16.msra.mxu0 0
  %593 = vmatprep.subr.bf16.mxu0 0
  %594 = vmatpush1.bf16.msra.mxu0 0
  %595 = vmatprep.subr.bf16.mxu0 0
  %596 = vmatpush1.bf16.msra.mxu0 0
  %597 = vmatprep.subr.bf16.mxu0 0
  %598 = vmatpush1.bf16.msra.mxu0 0
  %599 = vmatprep.subr.bf16.mxu0 0
  %600 = vmatpush1.bf16.msra.mxu0 0
  %601 = vmatprep.subr.bf16.mxu0 0
  %602 = vmatpush1.bf16.msra.mxu0 0
  %603 = vmatprep.subr.bf16.mxu0 0
  %604 = vmatpush1.bf16.msra.mxu0 0
  %605 = vmatprep.subr.bf16.mxu0 0
  %606 = vmatpush1.bf16.msra.mxu0 0
  %607 = vmatprep.subr.bf16.mxu0 0
  %608 = vmatpush1.bf16.msra.mxu0 0
  %609 = vmatprep.subr.bf16.mxu0 0
  %610 = vmatpush1.bf16.msra.mxu0 0
  %611 = vmatprep.subr.bf16.mxu0 0
  %612 = vmatpush1.bf16.msra.mxu0 0
  %613 = vmatprep.subr.bf16.mxu0 0
  %614 = vmatpush1.bf16.msra.mxu0 0
  %615 = vmatprep.subr.bf16.mxu0 0
  %616 = vmatpush1.bf16.msra.mxu0 0
  %617 = vmatprep.mubr.bf16.mxu0 0
  %618 = vmatmul.mubr.bf16.gmra.mrb[0].mxu0 %v583
  %v619 = vpop.f32.mrb[0].mxu0
  %v620 = vadd.f32 0.0, %v619
  %v621 = vpop.f32.mrb[0].mxu0
  %v622 = vpop.f32.mrb[0].mxu0
  %v623 = vpop.f32.mrb[0].mxu0
  %624 = vdwg.mxu0
  %v625 = vadd.f32 %v577, %v620
  %v626 = vtanh.pop %v625
  %v627 = vxor.u32 %v625, 2147483648
  %v628 = vmul.f32 %v627, 1.442695
  %v629 = vpow.pop %v628
  %v630 = vadd.f32 %v629, 1.0
  %v631 = vrcp.pop %v630
  %v632 = vmul.f32 1.0, %v631
  %v633 = vsel %vm193, %v626, %v632
  %v634 = vmul.f32 %v633, %v570
  %636 = vrot.lane.b32.xlu0 %v633, 64
  %v637 = vpop.permute.xlu0 %636
  %v639 = vmul.f32 %v633, %v637
  %641 = vrot.lane.b32.xlu0 %v639, 32
  %v642 = vpop.permute.xlu0 %641
  %v644 = vadd.f32 %v634, %v642
  %v645 = vtanh.pop %v644
  %647 = vrot.lane.b32.xlu0 %v645, 64
  %v648 = vpop.permute.xlu0 %647
  %v650 = vmul.f32 %v633, %v648
  %v651 = vld [vmem:[#allocation2 + $0x60] sm:$0xff]
  %v652 = vpack.c.bf16 %v650, %v650
  %654 = vrot.lane.b32.xlu0 %v652, 32
  %v655 = vpop.permute.xlu0 %654
  %v657 = vsel %vm211, %v655, 0
  %659 = vmatprep.subr.bf16.mxu0 0
  %660 = vmatpush1.bf16.msra.mxu0 %v207
  %661 = vmatprep.subr.bf16.mxu0 0
  %662 = vmatpush1.bf16.msra.mxu0 %v208
  %663 = vmatprep.subr.bf16.mxu0 0
  %664 = vmatpush1.bf16.msra.mxu0 0
  %665 = vmatprep.subr.bf16.mxu0 0
  %666 = vmatpush1.bf16.msra.mxu0 0
  %667 = vmatprep.subr.bf16.mxu0 0
  %668 = vmatpush1.bf16.msra.mxu0 0
  %669 = vmatprep.subr.bf16.mxu0 0
  %670 = vmatpush1.bf16.msra.mxu0 0
  %671 = vmatprep.subr.bf16.mxu0 0
  %672 = vmatpush1.bf16.msra.mxu0 0
  %673 = vmatprep.subr.bf16.mxu0 0
  %674 = vmatpush1.bf16.msra.mxu0 0
  %675 = vmatprep.subr.bf16.mxu0 0
  %676 = vmatpush1.bf16.msra.mxu0 0
  %677 = vmatprep.subr.bf16.mxu0 0
  %678 = vmatpush1.bf16.msra.mxu0 0
  %679 = vmatprep.subr.bf16.mxu0 0
  %680 = vmatpush1.bf16.msra.mxu0 0
  %681 = vmatprep.subr.bf16.mxu0 0
  %682 = vmatpush1.bf16.msra.mxu0 0
  %683 = vmatprep.subr.bf16.mxu0 0
  %684 = vmatpush1.bf16.msra.mxu0 0
  %685 = vmatprep.subr.bf16.mxu0 0
  %686 = vmatpush1.bf16.msra.mxu0 0
  %687 = vmatprep.subr.bf16.mxu0 0
  %688 = vmatpush1.bf16.msra.mxu0 0
  %689 = vmatprep.subr.bf16.mxu0 0
  %690 = vmatpush1.bf16.msra.mxu0 0
  %691 = vmatprep.mubr.bf16.mxu0 0
  %692 = vmatmul.mubr.bf16.gmra.mrb[0].mxu0 %v657
  %v693 = vpop.f32.mrb[0].mxu0
  %v694 = vadd.f32 0.0, %v693
  %v695 = vpop.f32.mrb[0].mxu0
  %v696 = vpop.f32.mrb[0].mxu0
  %v697 = vpop.f32.mrb[0].mxu0
  %698 = vdwg.mxu0
  %v699 = vadd.f32 %v651, %v694
  %v700 = vtanh.pop %v699
  %v701 = vxor.u32 %v699, 2147483648
  %v702 = vmul.f32 %v701, 1.442695
  %v703 = vpow.pop %v702
  %v704 = vadd.f32 %v703, 1.0
  %v705 = vrcp.pop %v704
  %v706 = vmul.f32 1.0, %v705
  %v707 = vsel %vm193, %v700, %v706
  %v708 = vmul.f32 %v707, %v644
  %710 = vrot.lane.b32.xlu0 %v707, 64
  %v711 = vpop.permute.xlu0 %710
  %v713 = vmul.f32 %v707, %v711
  %715 = vrot.lane.b32.xlu0 %v713, 32
  %v716 = vpop.permute.xlu0 %715
  %v718 = vadd.f32 %v708, %v716
  %v719 = vtanh.pop %v718
  %721 = vrot.lane.b32.xlu0 %v719, 64
  %v722 = vpop.permute.xlu0 %721
  %v724 = vmul.f32 %v707, %v722
  %v725 = vld [vmem:[#allocation2 + $0x70] sm:$0xff]
  %v726 = vpack.c.bf16 %v724, %v724
  %728 = vrot.lane.b32.xlu0 %v726, 32
  %v729 = vpop.permute.xlu0 %728
  %v731 = vsel %vm211, %v729, 0
  %733 = vmatprep.subr.bf16.mxu0 0
  %734 = vmatpush1.bf16.msra.mxu0 %v207
  %735 = vmatprep.subr.bf16.mxu0 0
  %736 = vmatpush1.bf16.msra.mxu0 %v208
  %737 = vmatprep.subr.bf16.mxu0 0
  %738 = vmatpush1.bf16.msra.mxu0 0
  %739 = vmatprep.subr.bf16.mxu0 0
  %740 = vmatpush1.bf16.msra.mxu0 0
  %741 = vmatprep.subr.bf16.mxu0 0
  %742 = vmatpush1.bf16.msra.mxu0 0
  %743 = vmatprep.subr.bf16.mxu0 0
  %744 = vmatpush1.bf16.msra.mxu0 0
  %745 = vmatprep.subr.bf16.mxu0 0
  %746 = vmatpush1.bf16.msra.mxu0 0
  %747 = vmatprep.subr.bf16.mxu0 0
  %748 = vmatpush1.bf16.msra.mxu0 0
  %749 = vmatprep.subr.bf16.mxu0 0
  %750 = vmatpush1.bf16.msra.mxu0 0
  %751 = vmatprep.subr.bf16.mxu0 0
  %752 = vmatpush1.bf16.msra.mxu0 0
  %753 = vmatprep.subr.bf16.mxu0 0
  %754 = vmatpush1.bf16.msra.mxu0 0
  %755 = vmatprep.subr.bf16.mxu0 0
  %756 = vmatpush1.bf16.msra.mxu0 0
  %757 = vmatprep.subr.bf16.mxu0 0
  %758 = vmatpush1.bf16.msra.mxu0 0
  %759 = vmatprep.subr.bf16.mxu0 0
  %760 = vmatpush1.bf16.msra.mxu0 0
  %761 = vmatprep.subr.bf16.mxu0 0
  %762 = vmatpush1.bf16.msra.mxu0 0
  %763 = vmatprep.subr.bf16.mxu0 0
  %764 = vmatpush1.bf16.msra.mxu0 0
  %765 = vmatprep.mubr.bf16.mxu0 0
  %766 = vmatmul.mubr.bf16.gmra.mrb[0].mxu0 %v731
  %v767 = vpop.f32.mrb[0].mxu0
  %v768 = vadd.f32 0.0, %v767
  %v769 = vpop.f32.mrb[0].mxu0
  %v770 = vpop.f32.mrb[0].mxu0
  %v771 = vpop.f32.mrb[0].mxu0
  %772 = vdwg.mxu0
  %v773 = vadd.f32 %v725, %v768
  %v774 = vtanh.pop %v773
  %v775 = vxor.u32 %v773, 2147483648
  %v776 = vmul.f32 %v775, 1.442695
  %v777 = vpow.pop %v776
  %v778 = vadd.f32 %v777, 1.0
  %v779 = vrcp.pop %v778
  %v780 = vmul.f32 1.0, %v779
  %v781 = vsel %vm193, %v774, %v780
  %v782 = vmul.f32 %v781, %v718
  %784 = vrot.lane.b32.xlu0 %v781, 64
  %v785 = vpop.permute.xlu0 %784
  %v787 = vmul.f32 %v781, %v785
  %789 = vrot.lane.b32.xlu0 %v787, 32
  %v790 = vpop.permute.xlu0 %789
  %v792 = vadd.f32 %v782, %v790
  %v793 = vtanh.pop %v792
  %795 = vrot.lane.b32.xlu0 %v793, 64
  %v796 = vpop.permute.xlu0 %795
  %v798 = vmul.f32 %v781, %v796
  %v799 = vpack.c.bf16 %v798, %v798
  %v800 = vld [vmem:[%s5] sm:$0xff]
  %v801 = vld [vmem:[%s5 + $0x8] sm:$0xf]
  %v802 = vld [vmem:[%s5 + $0xc] sm:$0xff]
  %v803 = vld [vmem:[%s5 + $0x14] sm:$0xf]
  %v804 = vld [vmem:[%s5 + $0x18] sm:$0xff]
  %v805 = vld [vmem:[%s5 + $0x20] sm:$0xf]
  %v806 = vld [vmem:[%s5 + $0x24] sm:$0xff]
  %v807 = vld [vmem:[%s5 + $0x2c] sm:$0xf]
  %v808 = vld [vmem:[%s6] sm:$0x7]
  %v810 = vlaneseq
  %v811 = vshrl.u32 %v810, 7
  %v812 = vsub.s32 0, %v811
  %v813 = vrot.slane %v808, %v812
  %v814 = vlaneseq
  %v815 = vshrl.u32 %v814, 7
  %v816 = vsub.s32 1, %v815
  %v817 = vrot.slane %v808, %v816
  %v818 = vlaneseq
  %v819 = vshrl.u32 %v818, 7
  %v820 = vsub.s32 2, %v819
  %v821 = vrot.slane %v808, %v820
  %826 = vrot.lane.b32.xlu0 %v799, 32
  %v827 = vpop.permute.xlu0 %826
  %v836 = vunpack.c.l.b16 %v800
  %v837 = vunpack.c.h.b16 %v800
  %v838 = vunpack.c.l.b16 %v801
  %v839 = vunpack.c.l.b16 %v802
  %v840 = vunpack.c.h.b16 %v802
  %v841 = vunpack.c.l.b16 %v803
  %v842 = vunpack.c.l.b16 %v804
  %v843 = vunpack.c.h.b16 %v804
  %v844 = vunpack.c.l.b16 %v805
  %v845 = vunpack.c.l.b16 %v806
  %v846 = vunpack.c.h.b16 %v806
  %v847 = vunpack.c.l.b16 %v807
  %v848 = vpack.c.b16 %v839, %v836
  %v849 = vpack.c.b16 %v840, %v837
  %v850 = vpack.c.b16 %v841, %v838
  %v851 = vpack.c.b16 %v845, %v842
  %v852 = vpack.c.b16 %v846, %v843
  %v853 = vpack.c.b16 %v847, %v844
  %v861 = vsel %vm211, %v827, 0
  %863 = vmatprep.subr.bf16.mxu0 %v849
  %864 = vmatpush1.bf16.msra.mxu0 %v848
  %865 = vmatprep.subr.bf16.mxu0 %v852
  %866 = vmatpush1.bf16.msra.mxu0 %v851
  %867 = vmatprep.subr.bf16.mxu0 0
  %868 = vmatpush1.bf16.msra.mxu0 0
  %869 = vmatprep.subr.bf16.mxu0 0
  %870 = vmatpush1.bf16.msra.mxu0 0
  %871 = vmatprep.subr.bf16.mxu0 0
  %872 = vmatpush1.bf16.msra.mxu0 0
  %873 = vmatprep.subr.bf16.mxu0 0
  %874 = vmatpush1.bf16.msra.mxu0 0
  %875 = vmatprep.subr.bf16.mxu0 0
  %876 = vmatpush1.bf16.msra.mxu0 0
  %877 = vmatprep.subr.bf16.mxu0 0
  %878 = vmatpush1.bf16.msra.mxu0 0
  %879 = vmatprep.subr.bf16.mxu0 0
  %880 = vmatpush1.bf16.msra.mxu0 0
  %881 = vmatprep.subr.bf16.mxu0 0
  %882 = vmatpush1.bf16.msra.mxu0 0
  %883 = vmatprep.subr.bf16.mxu0 0
  %884 = vmatpush1.bf16.msra.mxu0 0
  %885 = vmatprep.subr.bf16.mxu0 0
  %886 = vmatpush1.bf16.msra.mxu0 0
  %887 = vmatprep.subr.bf16.mxu0 0
  %888 = vmatpush1.bf16.msra.mxu0 0
  %889 = vmatprep.subr.bf16.mxu0 0
  %890 = vmatpush1.bf16.msra.mxu0 0
  %891 = vmatprep.subr.bf16.mxu0 0
  %892 = vmatpush1.bf16.msra.mxu0 0
  %893 = vmatprep.subr.bf16.mxu0 0
  %894 = vmatpush1.bf16.msra.mxu0 0
  %895 = vmatprep.mubr.bf16.mxu0 0
  %896 = vmatmul.mubr.bf16.gmra.mrb[0].mxu0 %v861
  %v897 = vpop.f32.mrb[0].mxu0
  %v898 = vadd.f32 %v813, %v897
  %v899 = vpop.f32.mrb[0].mxu0
  %v900 = vadd.f32 %v817, %v899
  %v901 = vpop.f32.mrb[0].mxu0
  %v902 = vpop.f32.mrb[0].mxu0
  %903 = vdwg.mxu0
  %904 = vmatprep.subr.bf16.mxu0 0
  %905 = vmatpush1.bf16.msra.mxu0 %v850
  %906 = vmatprep.subr.bf16.mxu0 0
  %907 = vmatpush1.bf16.msra.mxu0 %v853
  %908 = vmatprep.subr.bf16.mxu0 0
  %909 = vmatpush1.bf16.msra.mxu0 0
  %910 = vmatprep.subr.bf16.mxu0 0
  %911 = vmatpush1.bf16.msra.mxu0 0
  %912 = vmatprep.subr.bf16.mxu0 0
  %913 = vmatpush1.bf16.msra.mxu0 0
  %914 = vmatprep.subr.bf16.mxu0 0
  %915 = vmatpush1.bf16.msra.mxu0 0
  %916 = vmatprep.subr.bf16.mxu0 0
  %917 = vmatpush1.bf16.msra.mxu0 0
  %918 = vmatprep.subr.bf16.mxu0 0
  %919 = vmatpush1.bf16.msra.mxu0 0
  %920 = vmatprep.subr.bf16.mxu0 0
  %921 = vmatpush1.bf16.msra.mxu0 0
  %922 = vmatprep.subr.bf16.mxu0 0
  %923 = vmatpush1.bf16.msra.mxu0 0
  %924 = vmatprep.subr.bf16.mxu0 0
  %925 = vmatpush1.bf16.msra.mxu0 0
  %926 = vmatprep.subr.bf16.mxu0 0
  %927 = vmatpush1.bf16.msra.mxu0 0
  %928 = vmatprep.subr.bf16.mxu0 0
  %929 = vmatpush1.bf16.msra.mxu0 0
  %930 = vmatprep.subr.bf16.mxu0 0
  %931 = vmatpush1.bf16.msra.mxu0 0
  %932 = vmatprep.subr.bf16.mxu0 0
  %933 = vmatpush1.bf16.msra.mxu0 0
  %934 = vmatprep.subr.bf16.mxu0 0
  %935 = vmatpush1.bf16.msra.mxu0 0
  %936 = vmatprep.mubr.bf16.mxu0 0
  %937 = vmatmul.mubr.bf16.gmra.mrb[0].mxu0 %v861
  %v938 = vpop.f32.mrb[0].mxu0
  %v939 = vadd.f32 %v821, %v938
  %v940 = vpop.f32.mrb[0].mxu0
  %v941 = vpop.f32.mrb[0].mxu0
  %v942 = vpop.f32.mrb[0].mxu0
  %943 = vdwg.mxu0
  %944 = vst [vmem:[%s10] sm:$0xff] %v898
  %945 = vst [vmem:[%s10 + $0x8] sm:$0xff] %v900
  %v946 = vld [vmem:[%s4] sm:$0xf]
  %v947 = vld [vmem:[%s4 + $0x4] sm:$0xf]
  %v948 = vld [vmem:[%s4 + $0x8] sm:$0xf]
  %v949 = vld [vmem:[%s4 + $0xc] sm:$0xf]
  %v950 = vld [vmem:[#allocation2 + $0x8] sm:$0xff]
  %v951 = vpack.c.bf16 %v939, %v939
  %v956 = vunpack.c.l.b16 %v946
  %v957 = vunpack.c.l.b16 %v947
  %v958 = vunpack.c.l.b16 %v948
  %v959 = vunpack.c.l.b16 %v949
  %v960 = vpack.c.b16 %v957, %v956
  %v961 = vpack.c.b16 %v959, %v958
  %v965 = vsel %vm211, %v951, 0
  %967 = vmatprep.subr.bf16.mxu0 0
  %968 = vmatpush1.bf16.msra.mxu0 %v960
  %969 = vmatprep.subr.bf16.mxu0 0
  %970 = vmatpush1.bf16.msra.mxu0 %v961
  %971 = vmatprep.subr.bf16.mxu0 0
  %972 = vmatpush1.bf16.msra.mxu0 0
  %973 = vmatprep.subr.bf16.mxu0 0
  %974 = vmatpush1.bf16.msra.mxu0 0
  %975 = vmatprep.subr.bf16.mxu0 0
  %976 = vmatpush1.bf16.msra.mxu0 0
  %977 = vmatprep.subr.bf16.mxu0 0
  %978 = vmatpush1.bf16.msra.mxu0 0
  %979 = vmatprep.subr.bf16.mxu0 0
  %980 = vmatpush1.bf16.msra.mxu0 0
  %981 = vmatprep.subr.bf16.mxu0 0
  %982 = vmatpush1.bf16.msra.mxu0 0
  %983 = vmatprep.subr.bf16.mxu0 0
  %984 = vmatpush1.bf16.msra.mxu0 0
  %985 = vmatprep.subr.bf16.mxu0 0
  %986 = vmatpush1.bf16.msra.mxu0 0
  %987 = vmatprep.subr.bf16.mxu0 0
  %988 = vmatpush1.bf16.msra.mxu0 0
  %989 = vmatprep.subr.bf16.mxu0 0
  %990 = vmatpush1.bf16.msra.mxu0 0
  %991 = vmatprep.subr.bf16.mxu0 0
  %992 = vmatpush1.bf16.msra.mxu0 0
  %993 = vmatprep.subr.bf16.mxu0 0
  %994 = vmatpush1.bf16.msra.mxu0 0
  %995 = vmatprep.subr.bf16.mxu0 0
  %996 = vmatpush1.bf16.msra.mxu0 0
  %997 = vmatprep.subr.bf16.mxu0 0
  %998 = vmatpush1.bf16.msra.mxu0 0
  %999 = vmatprep.mubr.bf16.mxu0 0
  %1000 = vmatmul.mubr.bf16.gmra.mrb[0].mxu0 %v965
  %v1001 = vpop.f32.mrb[0].mxu0
  %v1002 = vadd.f32 0.0, %v1001
  %v1003 = vpop.f32.mrb[0].mxu0
  %v1004 = vpop.f32.mrb[0].mxu0
  %v1005 = vpop.f32.mrb[0].mxu0
  %1006 = vdwg.mxu0
  %v1007 = vadd.f32 %v950, %v1002
  %v1008 = vtanh.pop %v1007
  %v1009 = vxor.u32 %v1007, 2147483648
  %v1010 = vmul.f32 %v1009, 1.442695
  %v1011 = vpow.pop %v1010
  %v1012 = vadd.f32 %v1011, 1.0
  %v1013 = vrcp.pop %v1012
  %v1014 = vmul.f32 1.0, %v1013
  %v1015 = vsel %vm193, %v1008, %v1014
  %v1016 = vmul.f32 %v1015, 0.0
  %1018 = vrot.lane.b32.xlu0 %v1015, 64
  %v1019 = vpop.permute.xlu0 %1018
  %v1021 = vmul.f32 %v1015, %v1019
  %1023 = vrot.lane.b32.xlu0 %v1021, 32
  %v1024 = vpop.permute.xlu0 %1023
  %v1026 = vadd.f32 %v1016, %v1024
  %v1027 = vtanh.pop %v1026
  %1029 = vrot.lane.b32.xlu0 %v1027, 64
  %v1030 = vpop.permute.xlu0 %1029
  %v1032 = vmul.f32 %v1015, %v1030
  %1034 = vrot.lane.b32.xlu0 %v1032, 32
  %v1035 = vpop.permute.xlu0 %1034
  %1037 = vst.msk [vmem:[#allocation3] sm:$0xff] %vm211, %v1035
  %v1038 = vld [vmem:[#allocation2 + $0x18] sm:$0xff]
  %v1039 = vpack.c.bf16 %v1032, %v1032
  %1041 = vrot.lane.b32.xlu0 %v1039, 32
  %v1042 = vpop.permute.xlu0 %1041
  %v1044 = vsel %vm211, %v1042, 0
  %1046 = vmatprep.subr.bf16.mxu0 0
  %1047 = vmatpush1.bf16.msra.mxu0 %v960
  %1048 = vmatprep.subr.bf16.mxu0 0
  %1049 = vmatpush1.bf16.msra.mxu0 %v961
  %1050 = vmatprep.subr.bf16.mxu0 0
  %1051 = vmatpush1.bf16.msra.mxu0 0
  %1052 = vmatprep.subr.bf16.mxu0 0
  %1053 = vmatpush1.bf16.msra.mxu0 0
  %1054 = vmatprep.subr.bf16.mxu0 0
  %1055 = vmatpush1.bf16.msra.mxu0 0
  %1056 = vmatprep.subr.bf16.mxu0 0
  %1057 = vmatpush1.bf16.msra.mxu0 0
  %1058 = vmatprep.subr.bf16.mxu0 0
  %1059 = vmatpush1.bf16.msra.mxu0 0
  %1060 = vmatprep.subr.bf16.mxu0 0
  %1061 = vmatpush1.bf16.msra.mxu0 0
  %1062 = vmatprep.subr.bf16.mxu0 0
  %1063 = vmatpush1.bf16.msra.mxu0 0
  %1064 = vmatprep.subr.bf16.mxu0 0
  %1065 = vmatpush1.bf16.msra.mxu0 0
  %1066 = vmatprep.subr.bf16.mxu0 0
  %1067 = vmatpush1.bf16.msra.mxu0 0
  %1068 = vmatprep.subr.bf16.mxu0 0
  %1069 = vmatpush1.bf16.msra.mxu0 0
  %1070 = vmatprep.subr.bf16.mxu0 0
  %1071 = vmatpush1.bf16.msra.mxu0 0
  %1072 = vmatprep.subr.bf16.mxu0 0
  %1073 = vmatpush1.bf16.msra.mxu0 0
  %1074 = vmatprep.subr.bf16.mxu0 0
  %1075 = vmatpush1.bf16.msra.mxu0 0
  %1076 = vmatprep.subr.bf16.mxu0 0
  %1077 = vmatpush1.bf16.msra.mxu0 0
  %1078 = vmatprep.mubr.bf16.mxu0 0
  %1079 = vmatmul.mubr.bf16.gmra.mrb[0].mxu0 %v1044
  %v1080 = vpop.f32.mrb[0].mxu0
  %v1081 = vadd.f32 0.0, %v1080
  %v1082 = vpop.f32.mrb[0].mxu0
  %v1083 = vpop.f32.mrb[0].mxu0
  %v1084 = vpop.f32.mrb[0].mxu0
  %1085 = vdwg.mxu0
  %v1086 = vadd.f32 %v1038, %v1081
  %v1087 = vtanh.pop %v1086
  %v1088 = vxor.u32 %v1086, 2147483648
  %v1089 = vmul.f32 %v1088, 1.442695
  %v1090 = vpow.pop %v1089
  %v1091 = vadd.f32 %v1090, 1.0
  %v1092 = vrcp.pop %v1091
  %v1093 = vmul.f32 1.0, %v1092
  %v1094 = vsel %vm193, %v1087, %v1093
  %v1095 = vmul.f32 %v1094, %v1026
  %1097 = vrot.lane.b32.xlu0 %v1094, 64
  %v1098 = vpop.permute.xlu0 %1097
  %v1100 = vmul.f32 %v1094, %v1098
  %1102 = vrot.lane.b32.xlu0 %v1100, 32
  %v1103 = vpop.permute.xlu0 %1102
  %v1105 = vadd.f32 %v1095, %v1103
  %v1106 = vtanh.pop %v1105
  %1108 = vrot.lane.b32.xlu0 %v1106, 64
  %v1109 = vpop.permute.xlu0 %1108
  %v1111 = vmul.f32 %v1094, %v1109
  %1113 = vrot.lane.b32.xlu0 %v1111, 32
  %v1114 = vpop.permute.xlu0 %1113
  %1116 = vst.msk [vmem:[#allocation3 + $0x8] sm:$0xff] %vm211, %v1114
  %v1117 = vld [vmem:[#allocation2 + $0x28] sm:$0xff]
  %v1118 = vpack.c.bf16 %v1111, %v1111
  %1120 = vrot.lane.b32.xlu0 %v1118, 32
  %v1121 = vpop.permute.xlu0 %1120
  %v1123 = vsel %vm211, %v1121, 0
  %1125 = vmatprep.subr.bf16.mxu0 0
  %1126 = vmatpush1.bf16.msra.mxu0 %v960
  %1127 = vmatprep.subr.bf16.mxu0 0
  %1128 = vmatpush1.bf16.msra.mxu0 %v961
  %1129 = vmatprep.subr.bf16.mxu0 0
  %1130 = vmatpush1.bf16.msra.mxu0 0
  %1131 = vmatprep.subr.bf16.mxu0 0
  %1132 = vmatpush1.bf16.msra.mxu0 0
  %1133 = vmatprep.subr.bf16.mxu0 0
  %1134 = vmatpush1.bf16.msra.mxu0 0
  %1135 = vmatprep.subr.bf16.mxu0 0
  %1136 = vmatpush1.bf16.msra.mxu0 0
  %1137 = vmatprep.subr.bf16.mxu0 0
  %1138 = vmatpush1.bf16.msra.mxu0 0
  %1139 = vmatprep.subr.bf16.mxu0 0
  %1140 = vmatpush1.bf16.msra.mxu0 0
  %1141 = vmatprep.subr.bf16.mxu0 0
  %1142 = vmatpush1.bf16.msra.mxu0 0
  %1143 = vmatprep.subr.bf16.mxu0 0
  %1144 = vmatpush1.bf16.msra.mxu0 0
  %1145 = vmatprep.subr.bf16.mxu0 0
  %1146 = vmatpush1.bf16.msra.mxu0 0
  %1147 = vmatprep.subr.bf16.mxu0 0
  %1148 = vmatpush1.bf16.msra.mxu0 0
  %1149 = vmatprep.subr.bf16.mxu0 0
  %1150 = vmatpush1.bf16.msra.mxu0 0
  %1151 = vmatprep.subr.bf16.mxu0 0
  %1152 = vmatpush1.bf16.msra.mxu0 0
  %1153 = vmatprep.subr.bf16.mxu0 0
  %1154 = vmatpush1.bf16.msra.mxu0 0
  %1155 = vmatprep.subr.bf16.mxu0 0
  %1156 = vmatpush1.bf16.msra.mxu0 0
  %1157 = vmatprep.mubr.bf16.mxu0 0
  %1158 = vmatmul.mubr.bf16.gmra.mrb[0].mxu0 %v1123
  %v1159 = vpop.f32.mrb[0].mxu0
  %v1160 = vadd.f32 0.0, %v1159
  %v1161 = vpop.f32.mrb[0].mxu0
  %v1162 = vpop.f32.mrb[0].mxu0
  %v1163 = vpop.f32.mrb[0].mxu0
  %1164 = vdwg.mxu0
  %v1165 = vadd.f32 %v1117, %v1160
  %v1166 = vtanh.pop %v1165
  %v1167 = vxor.u32 %v1165, 2147483648
  %v1168 = vmul.f32 %v1167, 1.442695
  %v1169 = vpow.pop %v1168
  %v1170 = vadd.f32 %v1169, 1.0
  %v1171 = vrcp.pop %v1170
  %v1172 = vmul.f32 1.0, %v1171
  %v1173 = vsel %vm193, %v1166, %v1172
  %v1174 = vmul.f32 %v1173, %v1105
  %1176 = vrot.lane.b32.xlu0 %v1173, 64
  %v1177 = vpop.permute.xlu0 %1176
  %v1179 = vmul.f32 %v1173, %v1177
  %1181 = vrot.lane.b32.xlu0 %v1179, 32
  %v1182 = vpop.permute.xlu0 %1181
  %v1184 = vadd.f32 %v1174, %v1182
  %v1185 = vtanh.pop %v1184
  %1187 = vrot.lane.b32.xlu0 %v1185, 64
  %v1188 = vpop.permute.xlu0 %1187
  %v1190 = vmul.f32 %v1173, %v1188
  %1192 = vrot.lane.b32.xlu0 %v1190, 32
  %v1193 = vpop.permute.xlu0 %1192
  %1195 = vst.msk [vmem:[#allocation3 + $0x10] sm:$0xff] %vm211, %v1193
  %v1196 = vld [vmem:[#allocation2 + $0x38] sm:$0xff]
  %v1197 = vpack.c.bf16 %v1190, %v1190
  %1199 = vrot.lane.b32.xlu0 %v1197, 32
  %v1200 = vpop.permute.xlu0 %1199
  %v1202 = vsel %vm211, %v1200, 0
  %1204 = vmatprep.subr.bf16.mxu0 0
  %1205 = vmatpush1.bf16.msra.mxu0 %v960
  %1206 = vmatprep.subr.bf16.mxu0 0
  %1207 = vmatpush1.bf16.msra.mxu0 %v961
  %1208 = vmatprep.subr.bf16.mxu0 0
  %1209 = vmatpush1.bf16.msra.mxu0 0
  %1210 = vmatprep.subr.bf16.mxu0 0
  %1211 = vmatpush1.bf16.msra.mxu0 0
  %1212 = vmatprep.subr.bf16.mxu0 0
  %1213 = vmatpush1.bf16.msra.mxu0 0
  %1214 = vmatprep.subr.bf16.mxu0 0
  %1215 = vmatpush1.bf16.msra.mxu0 0
  %1216 = vmatprep.subr.bf16.mxu0 0
  %1217 = vmatpush1.bf16.msra.mxu0 0
  %1218 = vmatprep.subr.bf16.mxu0 0
  %1219 = vmatpush1.bf16.msra.mxu0 0
  %1220 = vmatprep.subr.bf16.mxu0 0
  %1221 = vmatpush1.bf16.msra.mxu0 0
  %1222 = vmatprep.subr.bf16.mxu0 0
  %1223 = vmatpush1.bf16.msra.mxu0 0
  %1224 = vmatprep.subr.bf16.mxu0 0
  %1225 = vmatpush1.bf16.msra.mxu0 0
  %1226 = vmatprep.subr.bf16.mxu0 0
  %1227 = vmatpush1.bf16.msra.mxu0 0
  %1228 = vmatprep.subr.bf16.mxu0 0
  %1229 = vmatpush1.bf16.msra.mxu0 0
  %1230 = vmatprep.subr.bf16.mxu0 0
  %1231 = vmatpush1.bf16.msra.mxu0 0
  %1232 = vmatprep.subr.bf16.mxu0 0
  %1233 = vmatpush1.bf16.msra.mxu0 0
  %1234 = vmatprep.subr.bf16.mxu0 0
  %1235 = vmatpush1.bf16.msra.mxu0 0
  %1236 = vmatprep.mubr.bf16.mxu0 0
  %1237 = vmatmul.mubr.bf16.gmra.mrb[0].mxu0 %v1202
  %v1238 = vpop.f32.mrb[0].mxu0
  %v1239 = vadd.f32 0.0, %v1238
  %v1240 = vpop.f32.mrb[0].mxu0
  %v1241 = vpop.f32.mrb[0].mxu0
  %v1242 = vpop.f32.mrb[0].mxu0
  %1243 = vdwg.mxu0
  %v1244 = vadd.f32 %v1196, %v1239
  %v1245 = vtanh.pop %v1244
  %v1246 = vxor.u32 %v1244, 2147483648
  %v1247 = vmul.f32 %v1246, 1.442695
  %v1248 = vpow.pop %v1247
  %v1249 = vadd.f32 %v1248, 1.0
  %v1250 = vrcp.pop %v1249
  %v1251 = vmul.f32 1.0, %v1250
  %v1252 = vsel %vm193, %v1245, %v1251
  %v1253 = vmul.f32 %v1252, %v1184
  %1255 = vrot.lane.b32.xlu0 %v1252, 64
  %v1256 = vpop.permute.xlu0 %1255
  %v1258 = vmul.f32 %v1252, %v1256
  %1260 = vrot.lane.b32.xlu0 %v1258, 32
  %v1261 = vpop.permute.xlu0 %1260
  %v1263 = vadd.f32 %v1253, %v1261
  %v1264 = vtanh.pop %v1263
  %1266 = vrot.lane.b32.xlu0 %v1264, 64
  %v1267 = vpop.permute.xlu0 %1266
  %v1269 = vmul.f32 %v1252, %v1267
  %1271 = vrot.lane.b32.xlu0 %v1269, 32
  %v1272 = vpop.permute.xlu0 %1271
  %1274 = vst.msk [vmem:[#allocation3 + $0x18] sm:$0xff] %vm211, %v1272
  %v1275 = vld [vmem:[#allocation2 + $0x48] sm:$0xff]
  %v1276 = vpack.c.bf16 %v1269, %v1269
  %1278 = vrot.lane.b32.xlu0 %v1276, 32
  %v1279 = vpop.permute.xlu0 %1278
  %v1281 = vsel %vm211, %v1279, 0
  %1283 = vmatprep.subr.bf16.mxu0 0
  %1284 = vmatpush1.bf16.msra.mxu0 %v960
  %1285 = vmatprep.subr.bf16.mxu0 0
  %1286 = vmatpush1.bf16.msra.mxu0 %v961
  %1287 = vmatprep.subr.bf16.mxu0 0
  %1288 = vmatpush1.bf16.msra.mxu0 0
  %1289 = vmatprep.subr.bf16.mxu0 0
  %1290 = vmatpush1.bf16.msra.mxu0 0
  %1291 = vmatprep.subr.bf16.mxu0 0
  %1292 = vmatpush1.bf16.msra.mxu0 0
  %1293 = vmatprep.subr.bf16.mxu0 0
  %1294 = vmatpush1.bf16.msra.mxu0 0
  %1295 = vmatprep.subr.bf16.mxu0 0
  %1296 = vmatpush1.bf16.msra.mxu0 0
  %1297 = vmatprep.subr.bf16.mxu0 0
  %1298 = vmatpush1.bf16.msra.mxu0 0
  %1299 = vmatprep.subr.bf16.mxu0 0
  %1300 = vmatpush1.bf16.msra.mxu0 0
  %1301 = vmatprep.subr.bf16.mxu0 0
  %1302 = vmatpush1.bf16.msra.mxu0 0
  %1303 = vmatprep.subr.bf16.mxu0 0
  %1304 = vmatpush1.bf16.msra.mxu0 0
  %1305 = vmatprep.subr.bf16.mxu0 0
  %1306 = vmatpush1.bf16.msra.mxu0 0
  %1307 = vmatprep.subr.bf16.mxu0 0
  %1308 = vmatpush1.bf16.msra.mxu0 0
  %1309 = vmatprep.subr.bf16.mxu0 0
  %1310 = vmatpush1.bf16.msra.mxu0 0
  %1311 = vmatprep.subr.bf16.mxu0 0
  %1312 = vmatpush1.bf16.msra.mxu0 0
  %1313 = vmatprep.subr.bf16.mxu0 0
  %1314 = vmatpush1.bf16.msra.mxu0 0
  %1315 = vmatprep.mubr.bf16.mxu0 0
  %1316 = vmatmul.mubr.bf16.gmra.mrb[0].mxu0 %v1281
  %v1317 = vpop.f32.mrb[0].mxu0
  %v1318 = vadd.f32 0.0, %v1317
  %v1319 = vpop.f32.mrb[0].mxu0
  %v1320 = vpop.f32.mrb[0].mxu0
  %v1321 = vpop.f32.mrb[0].mxu0
  %1322 = vdwg.mxu0
  %v1323 = vadd.f32 %v1275, %v1318
  %v1324 = vtanh.pop %v1323
  %v1325 = vxor.u32 %v1323, 2147483648
  %v1326 = vmul.f32 %v1325, 1.442695
  %v1327 = vpow.pop %v1326
  %v1328 = vadd.f32 %v1327, 1.0
  %v1329 = vrcp.pop %v1328
  %v1330 = vmul.f32 1.0, %v1329
  %v1331 = vsel %vm193, %v1324, %v1330
  %v1332 = vmul.f32 %v1331, %v1263
  %1334 = vrot.lane.b32.xlu0 %v1331, 64
  %v1335 = vpop.permute.xlu0 %1334
  %v1337 = vmul.f32 %v1331, %v1335
  %1339 = vrot.lane.b32.xlu0 %v1337, 32
  %v1340 = vpop.permute.xlu0 %1339
  %v1342 = vadd.f32 %v1332, %v1340
  %v1343 = vtanh.pop %v1342
  %1345 = vrot.lane.b32.xlu0 %v1343, 64
  %v1346 = vpop.permute.xlu0 %1345
  %v1348 = vmul.f32 %v1331, %v1346
  %1350 = vrot.lane.b32.xlu0 %v1348, 32
  %v1351 = vpop.permute.xlu0 %1350
  %1353 = vst.msk [vmem:[#allocation3 + $0x20] sm:$0xff] %vm211, %v1351
  %v1354 = vld [vmem:[#allocation2 + $0x58] sm:$0xff]
  %v1355 = vpack.c.bf16 %v1348, %v1348
  %1357 = vrot.lane.b32.xlu0 %v1355, 32
  %v1358 = vpop.permute.xlu0 %1357
  %v1360 = vsel %vm211, %v1358, 0
  %1362 = vmatprep.subr.bf16.mxu0 0
  %1363 = vmatpush1.bf16.msra.mxu0 %v960
  %1364 = vmatprep.subr.bf16.mxu0 0
  %1365 = vmatpush1.bf16.msra.mxu0 %v961
  %1366 = vmatprep.subr.bf16.mxu0 0
  %1367 = vmatpush1.bf16.msra.mxu0 0
  %1368 = vmatprep.subr.bf16.mxu0 0
  %1369 = vmatpush1.bf16.msra.mxu0 0
  %1370 = vmatprep.subr.bf16.mxu0 0
  %1371 = vmatpush1.bf16.msra.mxu0 0
  %1372 = vmatprep.subr.bf16.mxu0 0
  %1373 = vmatpush1.bf16.msra.mxu0 0
  %1374 = vmatprep.subr.bf16.mxu0 0
  %1375 = vmatpush1.bf16.msra.mxu0 0
  %1376 = vmatprep.subr.bf16.mxu0 0
  %1377 = vmatpush1.bf16.msra.mxu0 0
  %1378 = vmatprep.subr.bf16.mxu0 0
  %1379 = vmatpush1.bf16.msra.mxu0 0
  %1380 = vmatprep.subr.bf16.mxu0 0
  %1381 = vmatpush1.bf16.msra.mxu0 0
  %1382 = vmatprep.subr.bf16.mxu0 0
  %1383 = vmatpush1.bf16.msra.mxu0 0
  %1384 = vmatprep.subr.bf16.mxu0 0
  %1385 = vmatpush1.bf16.msra.mxu0 0
  %1386 = vmatprep.subr.bf16.mxu0 0
  %1387 = vmatpush1.bf16.msra.mxu0 0
  %1388 = vmatprep.subr.bf16.mxu0 0
  %1389 = vmatpush1.bf16.msra.mxu0 0
  %1390 = vmatprep.subr.bf16.mxu0 0
  %1391 = vmatpush1.bf16.msra.mxu0 0
  %1392 = vmatprep.subr.bf16.mxu0 0
  %1393 = vmatpush1.bf16.msra.mxu0 0
  %1394 = vmatprep.mubr.bf16.mxu0 0
  %1395 = vmatmul.mubr.bf16.gmra.mrb[0].mxu0 %v1360
  %v1396 = vpop.f32.mrb[0].mxu0
  %v1397 = vadd.f32 0.0, %v1396
  %v1398 = vpop.f32.mrb[0].mxu0
  %v1399 = vpop.f32.mrb[0].mxu0
  %v1400 = vpop.f32.mrb[0].mxu0
  %1401 = vdwg.mxu0
  %v1402 = vadd.f32 %v1354, %v1397
  %v1403 = vtanh.pop %v1402
  %v1404 = vxor.u32 %v1402, 2147483648
  %v1405 = vmul.f32 %v1404, 1.442695
  %v1406 = vpow.pop %v1405
  %v1407 = vadd.f32 %v1406, 1.0
  %v1408 = vrcp.pop %v1407
  %v1409 = vmul.f32 1.0, %v1408
  %v1410 = vsel %vm193, %v1403, %v1409
  %v1411 = vmul.f32 %v1410, %v1342
  %1413 = vrot.lane.b32.xlu0 %v1410, 64
  %v1414 = vpop.permute.xlu0 %1413
  %v1416 = vmul.f32 %v1410, %v1414
  %1418 = vrot.lane.b32.xlu0 %v1416, 32
  %v1419 = vpop.permute.xlu0 %1418
  %v1421 = vadd.f32 %v1411, %v1419
  %v1422 = vtanh.pop %v1421
  %1424 = vrot.lane.b32.xlu0 %v1422, 64
  %v1425 = vpop.permute.xlu0 %1424
  %v1427 = vmul.f32 %v1410, %v1425
  %1429 = vrot.lane.b32.xlu0 %v1427, 32
  %v1430 = vpop.permute.xlu0 %1429
  %1432 = vst.msk [vmem:[#allocation3 + $0x28] sm:$0xff] %vm211, %v1430
  %v1433 = vld [vmem:[#allocation2 + $0x68] sm:$0xff]
  %v1434 = vpack.c.bf16 %v1427, %v1427
  %1436 = vrot.lane.b32.xlu0 %v1434, 32
  %v1437 = vpop.permute.xlu0 %1436
  %v1439 = vsel %vm211, %v1437, 0
  %1441 = vmatprep.subr.bf16.mxu0 0
  %1442 = vmatpush1.bf16.msra.mxu0 %v960
  %1443 = vmatprep.subr.bf16.mxu0 0
  %1444 = vmatpush1.bf16.msra.mxu0 %v961
  %1445 = vmatprep.subr.bf16.mxu0 0
  %1446 = vmatpush1.bf16.msra.mxu0 0
  %1447 = vmatprep.subr.bf16.mxu0 0
  %1448 = vmatpush1.bf16.msra.mxu0 0
  %1449 = vmatprep.subr.bf16.mxu0 0
  %1450 = vmatpush1.bf16.msra.mxu0 0
  %1451 = vmatprep.subr.bf16.mxu0 0
  %1452 = vmatpush1.bf16.msra.mxu0 0
  %1453 = vmatprep.subr.bf16.mxu0 0
  %1454 = vmatpush1.bf16.msra.mxu0 0
  %1455 = vmatprep.subr.bf16.mxu0 0
  %1456 = vmatpush1.bf16.msra.mxu0 0
  %1457 = vmatprep.subr.bf16.mxu0 0
  %1458 = vmatpush1.bf16.msra.mxu0 0
  %1459 = vmatprep.subr.bf16.mxu0 0
  %1460 = vmatpush1.bf16.msra.mxu0 0
  %1461 = vmatprep.subr.bf16.mxu0 0
  %1462 = vmatpush1.bf16.msra.mxu0 0
  %1463 = vmatprep.subr.bf16.mxu0 0
  %1464 = vmatpush1.bf16.msra.mxu0 0
  %1465 = vmatprep.subr.bf16.mxu0 0
  %1466 = vmatpush1.bf16.msra.mxu0 0
  %1467 = vmatprep.subr.bf16.mxu0 0
  %1468 = vmatpush1.bf16.msra.mxu0 0
  %1469 = vmatprep.subr.bf16.mxu0 0
  %1470 = vmatpush1.bf16.msra.mxu0 0
  %1471 = vmatprep.subr.bf16.mxu0 0
  %1472 = vmatpush1.bf16.msra.mxu0 0
  %1473 = vmatprep.mubr.bf16.mxu0 0
  %1474 = vmatmul.mubr.bf16.gmra.mrb[0].mxu0 %v1439
  %v1475 = vpop.f32.mrb[0].mxu0
  %v1476 = vadd.f32 0.0, %v1475
  %v1477 = vpop.f32.mrb[0].mxu0
  %v1478 = vpop.f32.mrb[0].mxu0
  %v1479 = vpop.f32.mrb[0].mxu0
  %1480 = vdwg.mxu0
  %v1481 = vadd.f32 %v1433, %v1476
  %v1482 = vtanh.pop %v1481
  %v1483 = vxor.u32 %v1481, 2147483648
  %v1484 = vmul.f32 %v1483, 1.442695
  %v1485 = vpow.pop %v1484
  %v1486 = vadd.f32 %v1485, 1.0
  %v1487 = vrcp.pop %v1486
  %v1488 = vmul.f32 1.0, %v1487
  %v1489 = vsel %vm193, %v1482, %v1488
  %v1490 = vmul.f32 %v1489, %v1421
  %1492 = vrot.lane.b32.xlu0 %v1489, 64
  %v1493 = vpop.permute.xlu0 %1492
  %v1495 = vmul.f32 %v1489, %v1493
  %1497 = vrot.lane.b32.xlu0 %v1495, 32
  %v1498 = vpop.permute.xlu0 %1497
  %v1500 = vadd.f32 %v1490, %v1498
  %v1501 = vtanh.pop %v1500
  %1503 = vrot.lane.b32.xlu0 %v1501, 64
  %v1504 = vpop.permute.xlu0 %1503
  %v1506 = vmul.f32 %v1489, %v1504
  %1508 = vrot.lane.b32.xlu0 %v1506, 32
  %v1509 = vpop.permute.xlu0 %1508
  %1511 = vst.msk [vmem:[#allocation3 + $0x30] sm:$0xff] %vm211, %v1509
  %v1512 = vld [vmem:[#allocation2 + $0x78] sm:$0xff]
  %v1513 = vpack.c.bf16 %v1506, %v1506
  %1515 = vrot.lane.b32.xlu0 %v1513, 32
  %v1516 = vpop.permute.xlu0 %1515
  %v1518 = vsel %vm211, %v1516, 0
  %1520 = vmatprep.subr.bf16.mxu0 0
  %1521 = vmatpush1.bf16.msra.mxu0 %v960
  %1522 = vmatprep.subr.bf16.mxu0 0
  %1523 = vmatpush1.bf16.msra.mxu0 %v961
  %1524 = vmatprep.subr.bf16.mxu0 0
  %1525 = vmatpush1.bf16.msra.mxu0 0
  %1526 = vmatprep.subr.bf16.mxu0 0
  %1527 = vmatpush1.bf16.msra.mxu0 0
  %1528 = vmatprep.subr.bf16.mxu0 0
  %1529 = vmatpush1.bf16.msra.mxu0 0
  %1530 = vmatprep.subr.bf16.mxu0 0
  %1531 = vmatpush1.bf16.msra.mxu0 0
  %1532 = vmatprep.subr.bf16.mxu0 0
  %1533 = vmatpush1.bf16.msra.mxu0 0
  %1534 = vmatprep.subr.bf16.mxu0 0
  %1535 = vmatpush1.bf16.msra.mxu0 0
  %1536 = vmatprep.subr.bf16.mxu0 0
  %1537 = vmatpush1.bf16.msra.mxu0 0
  %1538 = vmatprep.subr.bf16.mxu0 0
  %1539 = vmatpush1.bf16.msra.mxu0 0
  %1540 = vmatprep.subr.bf16.mxu0 0
  %1541 = vmatpush1.bf16.msra.mxu0 0
  %1542 = vmatprep.subr.bf16.mxu0 0
  %1543 = vmatpush1.bf16.msra.mxu0 0
  %1544 = vmatprep.subr.bf16.mxu0 0
  %1545 = vmatpush1.bf16.msra.mxu0 0
  %1546 = vmatprep.subr.bf16.mxu0 0
  %1547 = vmatpush1.bf16.msra.mxu0 0
  %1548 = vmatprep.subr.bf16.mxu0 0
  %1549 = vmatpush1.bf16.msra.mxu0 0
  %1550 = vmatprep.subr.bf16.mxu0 0
  %1551 = vmatpush1.bf16.msra.mxu0 0
  %1552 = vmatprep.mubr.bf16.mxu0 0
  %1553 = vmatmul.mubr.bf16.gmra.mrb[0].mxu0 %v1518
  %v1554 = vpop.f32.mrb[0].mxu0
  %v1555 = vadd.f32 0.0, %v1554
  %v1556 = vpop.f32.mrb[0].mxu0
  %v1557 = vpop.f32.mrb[0].mxu0
  %v1558 = vpop.f32.mrb[0].mxu0
  %1559 = vdwg.mxu0
  %v1560 = vadd.f32 %v1512, %v1555
  %v1561 = vtanh.pop %v1560
  %v1562 = vxor.u32 %v1560, 2147483648
  %v1563 = vmul.f32 %v1562, 1.442695
  %v1564 = vpow.pop %v1563
  %v1565 = vadd.f32 %v1564, 1.0
  %v1566 = vrcp.pop %v1565
  %v1567 = vmul.f32 1.0, %v1566
  %v1568 = vsel %vm193, %v1561, %v1567
  %v1569 = vmul.f32 %v1568, %v1500
  %1571 = vrot.lane.b32.xlu0 %v1568, 64
  %v1572 = vpop.permute.xlu0 %1571
  %v1574 = vmul.f32 %v1568, %v1572
  %1576 = vrot.lane.b32.xlu0 %v1574, 32
  %v1577 = vpop.permute.xlu0 %1576
  %v1579 = vadd.f32 %v1569, %v1577
  %v1580 = vtanh.pop %v1579
  %1582 = vrot.lane.b32.xlu0 %v1580, 64
  %v1583 = vpop.permute.xlu0 %1582
  %v1585 = vmul.f32 %v1568, %v1583
  %1587 = vrot.lane.b32.xlu0 %v1585, 32
  %v1588 = vpop.permute.xlu0 %1587
  %1590 = vst.msk [vmem:[#allocation3 + $0x38] sm:$0xff] %vm211, %v1588
  %v1591 = vld [vmem:[#allocation3] sm:$0xff]
  %v1592 = vld [vmem:[#allocation3 + $0x8] sm:$0xff]
  %v1593 = vld [vmem:[#allocation3 + $0x10] sm:$0xff]
  %v1594 = vld [vmem:[#allocation3 + $0x18] sm:$0xff]
  %v1595 = vld [vmem:[#allocation3 + $0x20] sm:$0xff]
  %v1596 = vld [vmem:[#allocation3 + $0x28] sm:$0xff]
  %v1597 = vld [vmem:[#allocation3 + $0x30] sm:$0xff]
  %v1598 = vld [vmem:[#allocation3 + $0x38] sm:$0xff]
  %v1599 = vpack.c.bf16 %v1592, %v1591
  %v1600 = vpack.c.bf16 %v1594, %v1593
  %v1601 = vpack.c.bf16 %v1596, %v1595
  %v1602 = vpack.c.bf16 %v1598, %v1597
  %v1603 = vld [vmem:[%s7] sm:$0xf]
  %v1604 = vld [vmem:[%s7 + $0x4] sm:$0xf]
  %v1605 = vld [vmem:[%s7 + $0x8] sm:$0xf]
  %v1606 = vld [vmem:[%s7 + $0xc] sm:$0xf]
  %v1607 = vld [vmem:[%s8] sm:$0x1]
  %v1609 = vlaneseq
  %v1610 = vshrl.u32 %v1609, 7
  %v1611 = vsub.s32 0, %v1610
  %v1612 = vrot.slane %v1607, %v1611
  %v1618 = vunpack.c.l.b16 %v1603
  %v1619 = vunpack.c.l.b16 %v1604
  %v1620 = vunpack.c.l.b16 %v1605
  %v1621 = vunpack.c.l.b16 %v1606
  %v1622 = vpack.c.b16 %v1619, %v1618
  %v1623 = vpack.c.b16 %v1621, %v1620
  %v1627 = vsel %vm211, %v1599, 0
  %v1630 = vsel %vm211, %v1600, 0
  %v1633 = vsel %vm211, %v1601, 0
  %v1636 = vsel %vm211, %v1602, 0
  %1638 = vmatprep.subr.bf16.mxu0 0
  %1639 = vmatpush1.bf16.msra.mxu0 %v1622
  %1640 = vmatprep.subr.bf16.mxu0 0
  %1641 = vmatpush1.bf16.msra.mxu0 %v1623
  %1642 = vmatprep.subr.bf16.mxu0 0
  %1643 = vmatpush1.bf16.msra.mxu0 0
  %1644 = vmatprep.subr.bf16.mxu0 0
  %1645 = vmatpush1.bf16.msra.mxu0 0
  %1646 = vmatprep.subr.bf16.mxu0 0
  %1647 = vmatpush1.bf16.msra.mxu0 0
  %1648 = vmatprep.subr.bf16.mxu0 0
  %1649 = vmatpush1.bf16.msra.mxu0 0
  %1650 = vmatprep.subr.bf16.mxu0 0
  %1651 = vmatpush1.bf16.msra.mxu0 0
  %1652 = vmatprep.subr.bf16.mxu0 0
  %1653 = vmatpush1.bf16.msra.mxu0 0
  %1654 = vmatprep.subr.bf16.mxu0 0
  %1655 = vmatpush1.bf16.msra.mxu0 0
  %1656 = vmatprep.subr.bf16.mxu0 0
  %1657 = vmatpush1.bf16.msra.mxu0 0
  %1658 = vmatprep.subr.bf16.mxu0 0
  %1659 = vmatpush1.bf16.msra.mxu0 0
  %1660 = vmatprep.subr.bf16.mxu0 0
  %1661 = vmatpush1.bf16.msra.mxu0 0
  %1662 = vmatprep.subr.bf16.mxu0 0
  %1663 = vmatpush1.bf16.msra.mxu0 0
  %1664 = vmatprep.subr.bf16.mxu0 0
  %1665 = vmatpush1.bf16.msra.mxu0 0
  %1666 = vmatprep.subr.bf16.mxu0 0
  %1667 = vmatpush1.bf16.msra.mxu0 0
  %1668 = vmatprep.subr.bf16.mxu0 0
  %1669 = vmatpush1.bf16.msra.mxu0 0
  %1670 = vmatprep.mubr.bf16.mxu0 0
  %1671 = vmatmul.mubr.bf16.gmra.mrb[0].mxu0 %v1627
  %v1672 = vpop.f32.mrb[0].mxu0
  %v1673 = vadd.f32 %v1612, %v1672
  %v1674 = vpop.f32.mrb[0].mxu0
  %v1675 = vpop.f32.mrb[0].mxu0
  %v1676 = vadd.f32 %v1612, %v1675
  %v1677 = vpop.f32.mrb[0].mxu0
  %1678 = vmatprep.mubr.bf16.mxu0 0
  %1679 = vmatmul.mubr.bf16.gmra.mrb[0].mxu0 %v1630
  %v1680 = vpop.f32.mrb[0].mxu0
  %v1681 = vadd.f32 %v1612, %v1680
  %v1682 = vpop.f32.mrb[0].mxu0
  %v1683 = vpop.f32.mrb[0].mxu0
  %v1684 = vadd.f32 %v1612, %v1683
  %v1685 = vpop.f32.mrb[0].mxu0
  %1686 = vmatprep.mubr.bf16.mxu0 0
  %1687 = vmatmul.mubr.bf16.gmra.mrb[0].mxu0 %v1633
  %v1688 = vpop.f32.mrb[0].mxu0
  %v1689 = vadd.f32 %v1612, %v1688
  %v1690 = vpop.f32.mrb[0].mxu0
  %v1691 = vpop.f32.mrb[0].mxu0
  %v1692 = vadd.f32 %v1612, %v1691
  %v1693 = vpop.f32.mrb[0].mxu0
  %1694 = vmatprep.mubr.bf16.mxu0 0
  %1695 = vmatmul.mubr.bf16.gmra.mrb[0].mxu0 %v1636
  %v1696 = vpop.f32.mrb[0].mxu0
  %v1697 = vadd.f32 %v1612, %v1696
  %v1698 = vpop.f32.mrb[0].mxu0
  %v1699 = vpop.f32.mrb[0].mxu0
  %v1700 = vadd.f32 %v1612, %v1699
  %v1701 = vpop.f32.mrb[0].mxu0
  %1702 = vdwg.mxu0
  %1703 = vst [vmem:[%s9] sm:$0xff] %v1673
  %1704 = vst [vmem:[%s9 + $0x8] sm:$0xff] %v1676
  %1705 = vst [vmem:[%s9 + $0x10] sm:$0xff] %v1681
  %1706 = vst [vmem:[%s9 + $0x18] sm:$0xff] %v1684
  %1707 = vst [vmem:[%s9 + $0x20] sm:$0xff] %v1689
  %1708 = vst [vmem:[%s9 + $0x28] sm:$0xff] %v1692
  %1709 = vst [vmem:[%s9 + $0x30] sm:$0xff] %v1697
  %1710 = vst [vmem:[%s9 + $0x38] sm:$0xff] %v1700
  // Predicated region
  $region38: #{bvae_lstm_forward.1} parent=0 // pred_check
    _
  $region39: #{bvae_lstm_forward.1} parent=0 // pred_check_branch
    %1712 = sbr.rel (0) target = $region41
  $region40: #{bvae_lstm_forward.1} parent=0 // pred_region
    _
  $region41: #{bvae_lstm_forward.1} parent=0 // pred_fallthru
    _
  // Predicated region
  $region42: #{bvae_lstm_forward.1} parent=0 // pred_check
    _
  $region43: #{bvae_lstm_forward.1} parent=0 // pred_check_branch
    %1714 = sbr.rel (0) target = $region45
  $region44: #{bvae_lstm_forward.1} parent=0 // pred_region
    _
  $region45: #{bvae_lstm_forward.1} parent=0 // pred_fallthru
    _
  // Predicated region
  $region46: #{bvae_lstm_forward.1} parent=0 // pred_check
    _
  $region47: #{bvae_lstm_forward.1} parent=0 // pred_check_branch
    %1716 = sbr.rel (0) target = $region49
  $region48: #{bvae_lstm_forward.1} parent=0 // pred_region
    _
  $region49: #{bvae_lstm_forward.1} parent=0 // pred_fallthru
    _
  // Predicated region
  $region50: #{bvae_lstm_forward.1} parent=0 // pred_check
    _
  $region51: #{bvae_lstm_forward.1} parent=0 // pred_check_branch
    %1718 = sbr.rel (0) target = $region53
  $region52: #{bvae_lstm_forward.1} parent=0 // pred_region
    _
  $region53: #{bvae_lstm_forward.1} parent=0 // pred_fallthru
    _

</llo_original>
